<compile_context>
chip_gen: v5e
topology: v5e:2x2
jax: 0.10.0
libtpu: 0.0.40
codegen_flags: <defaults>
</compile_context>

<pallas_src>
import functools

import jax
import jax.numpy as jnp
from jax import lax
from jax.experimental import pallas as pl
from jax.experimental.pallas import tpu as pltpu

D_MODEL = 32
N_HEAD = 4
D_HEAD = D_MODEL // N_HEAD          # 8
D_FF = 64
N_EXPERTS = 4
EF = N_EXPERTS * D_FF               # 256
N_LAYERS = 2
EPS = 1e-5

# ---------------- packed-slab layout (row offsets, 16-aligned for bf16) ------
PACK_COLS = EF                       # 256 >= 3*D_MODEL
ROW_WQKV = 0                         # (D, 3D)
ROW_WO   = ROW_WQKV + D_MODEL        # (D, D)
ROW_WG   = ROW_WO + D_MODEL          # (D, E)
ROW_EEXP = ROW_WG + D_MODEL          # (E, E*F)  0/1 gate expander
ROW_W1S  = ROW_EEXP + 16             # (D, E*F)
ROW_W2S  = ROW_W1S + D_MODEL         # (E*F, D)
W_ROWS   = ROW_W2S + EF              # 400

BROW_BQKV = 0
BROW_BO   = 1
BROW_LN1G = 2
BROW_LN1B = 3
BROW_BG   = 4
BROW_B1S  = 5
BROW_B2   = 8                        # 4 rows
BROW_LN2G = 12
BROW_LN2B = 13
B_ROWS    = 16


def _layernorm(x, g, b):
    mu = jnp.mean(x, axis=-1, keepdims=True)
    var = jnp.mean((x - mu) ** 2, axis=-1, keepdims=True)
    return (x - mu) * lax.rsqrt(var + EPS) * g + b


def _encoder_kernel(num_layers, B, S, x_ref, frac_ref, w_ref, b_ref, out_ref):
    """Whole encoder stack (all layers, whole batch) in a single invocation."""
    N = B * S
    D = D_MODEL
    f32 = jnp.float32
    bf16 = jnp.bfloat16

    # ---- carve packed bf16 weight slab (MXU operands, stay resident) --------
    wqkv = w_ref[ROW_WQKV:ROW_WQKV + D, 0:3 * D]          # (D, 3D), Q pre-scaled
    wo   = w_ref[ROW_WO:ROW_WO + D, 0:D]                  # (D, D)
    wg   = w_ref[ROW_WG:ROW_WG + D, 0:N_EXPERTS]          # (D, E)
    eexp = w_ref[ROW_EEXP:ROW_EEXP + N_EXPERTS, 0:EF]     # (E, E*F)
    w1s  = w_ref[ROW_W1S:ROW_W1S + D, 0:EF]               # (D, E*F)
    w2s  = w_ref[ROW_W2S:ROW_W2S + EF, 0:D]               # (E*F, D)

    # ---- carve packed f32 bias / LayerNorm slab ------------------------------
    bqkv = b_ref[BROW_BQKV:BROW_BQKV + 1, 0:3 * D]
    bo   = b_ref[BROW_BO:BROW_BO + 1, 0:D]
    ln1g = b_ref[BROW_LN1G:BROW_LN1G + 1, 0:D]
    ln1b = b_ref[BROW_LN1B:BROW_LN1B + 1, 0:D]
    bg   = b_ref[BROW_BG:BROW_BG + 1, 0:N_EXPERTS]
    b1s  = b_ref[BROW_B1S:BROW_B1S + 1, 0:EF]
    b2   = b_ref[BROW_B2:BROW_B2 + N_EXPERTS, 0:D]        # (E, D)
    ln2g = b_ref[BROW_LN2G:BROW_LN2G + 1, 0:D]
    ln2b = b_ref[BROW_LN2B:BROW_LN2B + 1, 0:D]

    x = x_ref[...].reshape(N, D)                           # (N, D) f32

    # |frac_i - frac_j| recomputed from the O(S)-sized frac view (layer 0 only)
    fcol = frac_ref[...]                                    # (B, 1, S)
    frow = jnp.swapaxes(fcol, 1, 2)                         # (B, S, 1)
    fd = jnp.abs(frow - fcol)                               # (B, S, S)

    for layer in range(num_layers):          # static unroll; layers share weights
        add_bias = layer == 0                # stoich. frac bias only on layer 0

        # ---- fused QKV projection (1/sqrt(Dh) folded into Q columns) --------
        qkv = jnp.dot(x.astype(bf16), wqkv, preferred_element_type=f32) + bqkv
        qkv_bf = qkv.astype(bf16)
        q3 = qkv_bf[:, 0:D].reshape(B, S, D)
        k3 = qkv_bf[:, D:2 * D].reshape(B, S, D)
        v3 = qkv_bf[:, 2 * D:3 * D].reshape(B, S, D)

        # ---- multi-head attention; one full-width output projection ---------
        ctx_heads = []
        for h in range(N_HEAD):
            lo, hi = h * D_HEAD, (h + 1) * D_HEAD
            s = jnp.einsum('bqd,bkd->bqk', q3[:, :, lo:hi], k3[:, :, lo:hi],
                           preferred_element_type=f32)      # already scaled
            if add_bias:
                s = s - (2.0 ** (-(h + 1))) * fd             # ALiBi-style slope
            m = jnp.max(s, axis=-1, keepdims=True)
            p = jnp.exp(s - m)
            p = p * pl.reciprocal(jnp.sum(p, axis=-1, keepdims=True), approx=True)
            ctx_heads.append(
                jnp.einsum('bqk,bkd->bqd', p.astype(bf16), v3[:, :, lo:hi],
                           preferred_element_type=f32))
        ctx = jnp.concatenate(ctx_heads, axis=-1).reshape(N, D)   # head concat
        attn = jnp.dot(ctx.astype(bf16), wo, preferred_element_type=f32) + bo

        # ---- residual + LayerNorm 1 ------------------------------------------
        h1 = _layernorm(x + attn, ln1g, ln1b)
        h1_bf = h1.astype(bf16)

        # ---- MoE FFN: soft routing, experts fused into two wide matmuls ------
        gl = jnp.dot(h1_bf, wg, preferred_element_type=f32) + bg
        gm = jnp.max(gl, axis=-1, keepdims=True)
        ge = jnp.exp(gl - gm)
        gate = ge * pl.reciprocal(jnp.sum(ge, axis=-1, keepdims=True), approx=True)
        hdn = jnp.maximum(jnp.dot(h1_bf, w1s, preferred_element_type=f32) + b1s, 0.0)
        gate_wide = jnp.dot(gate.astype(bf16), eexp, preferred_element_type=f32)
        moe = jnp.dot((hdn * gate_wide).astype(bf16), w2s,
                      preferred_element_type=f32)
        moe = moe + jnp.dot(gate, b2, preferred_element_type=f32)   # expert biases

        # ---- residual + LayerNorm 2 ------------------------------------------
        x = _layernorm(h1 + moe, ln2g, ln2b)

    out_ref[...] = x.reshape(B, S, D)


def pack_params(params):
    """One-time weight packing/stacking -- hoisted out of the forward path."""
    (wq, bq, wk, bk, wv, bv, wo, bo, g1, be1,
     wg, bg, w1, b1, w2, b2, g2, be2) = params
    scale = 1.0 / (D_HEAD ** 0.5)
    # Fold 1/sqrt(Dh) into the Q projection (weight + bias) once.
    wqkv = jnp.concatenate([wq * scale, wk, wv], axis=1)              # (D, 3D)
    bqkv = jnp.concatenate([bq * scale, bk, bv], axis=1)              # (1, 3D)
    w1s = jnp.transpose(w1, (1, 0, 2)).reshape(D_MODEL, EF)           # (D, E*F)
    b1s = b1.reshape(1, EF)                                           # (1, E*F)
    w2s = w2.reshape(EF, D_MODEL)                                     # (E*F, D)
    eexp = jnp.repeat(jnp.eye(N_EXPERTS, dtype=jnp.float32), D_FF, axis=1)

    W = jnp.zeros((W_ROWS, PACK_COLS), jnp.float32)
    W = W.at[ROW_WQKV:ROW_WQKV + D_MODEL, 0:3 * D_MODEL].set(wqkv)
    W = W.at[ROW_WO:ROW_WO + D_MODEL, 0:D_MODEL].set(wo)
    W = W.at[ROW_WG:ROW_WG + D_MODEL, 0:N_EXPERTS].set(wg)
    W = W.at[ROW_EEXP:ROW_EEXP + N_EXPERTS, 0:EF].set(eexp)
    W = W.at[ROW_W1S:ROW_W1S + D_MODEL, 0:EF].set(w1s)
    W = W.at[ROW_W2S:ROW_W2S + EF, 0:D_MODEL].set(w2s)
    Wb = W.astype(jnp.bfloat16)            # MXU operands travel & live as bf16

    Bv = jnp.zeros((B_ROWS, PACK_COLS), jnp.float32)
    Bv = Bv.at[BROW_BQKV, 0:3 * D_MODEL].set(bqkv[0])
    Bv = Bv.at[BROW_BO, 0:D_MODEL].set(bo[0])
    Bv = Bv.at[BROW_LN1G, 0:D_MODEL].set(g1[0])
    Bv = Bv.at[BROW_LN1B, 0:D_MODEL].set(be1[0])
    Bv = Bv.at[BROW_BG, 0:N_EXPERTS].set(bg[0])
    Bv = Bv.at[BROW_B1S, 0:EF].set(b1s[0])
    Bv = Bv.at[BROW_B2:BROW_B2 + N_EXPERTS, 0:D_MODEL].set(b2)
    Bv = Bv.at[BROW_LN2G, 0:D_MODEL].set(g2[0])
    Bv = Bv.at[BROW_LN2B, 0:D_MODEL].set(be2[0])
    return Wb, Bv


def encoder_moe_stoich(src, frac, packed_w, packed_b, num_layers=N_LAYERS):
    """Pallas equivalent of CustomTransformerEncoderMoEStoich.forward."""
    # TODO(synk): src_mask / src_key_padding_mask / dropout are not modeled
    #             (forward is exercised with mask=None, eval mode).
    B, S, D = src.shape
    assert D == D_MODEL
    frac_row = frac[:, None, :].astype(jnp.float32)          # (B, 1, S) lane-dense

    kernel = functools.partial(_encoder_kernel, num_layers, B, S)
    vmem = pltpu.MemorySpace.VMEM
    # NOTE: input_output_aliases={0: 0} would save the output HBM alloc once
    # B*S scales; negligible at this size, so omitted for simplicity.
    out = pl.pallas_call(
        kernel,
        out_shape=jax.ShapeDtypeStruct((B, S, D), jnp.float32),
        in_specs=[pl.BlockSpec(memory_space=vmem)] * 4,
        out_specs=pl.BlockSpec(memory_space=vmem),
    )(src, frac_row, packed_w, packed_b)
    return out


# ----------------------------- pure-JAX reference -----------------------------
def _ln(x, g, b):
    mu = jnp.mean(x, axis=-1, keepdims=True)
    var = jnp.mean((x - mu) ** 2, axis=-1, keepdims=True)
    return (x - mu) * lax.rsqrt(var + EPS) * g + b


def _ref_layer(x, fdiff, params, add_frac_bias):
    (wq, bq, wk, bk, wv, bv, wo, bo, g1, be1,
     wg, bg, w1, b1, w2, b2, g2, be2) = params
    B, S, D = x.shape
    q = (x @ wq + bq).reshape(B, S, N_HEAD, D_HEAD).transpose(0, 2, 1, 3)
    k = (x @ wk + bk).reshape(B, S, N_HEAD, D_HEAD).transpose(0, 2, 1, 3)
    v = (x @ wv + bv).reshape(B, S, N_HEAD, D_HEAD).transpose(0, 2, 1, 3)
    scores = jnp.einsum('bhqd,bhkd->bhqk', q, k) / (D_HEAD ** 0.5)
    if add_frac_bias:
        slopes = 2.0 ** (-(jnp.arange(N_HEAD, dtype=jnp.float32) + 1.0))
        scores = scores - slopes[None, :, None, None] * fdiff[:, None]
    p = jax.nn.softmax(scores, axis=-1)
    attn = jnp.einsum('bhqk,bhkd->bhqd', p, v).transpose(0, 2, 1, 3).reshape(B, S, D)
    attn = attn @ wo + bo
    h1 = _ln(x + attn, g1, be1)
    gate = jax.nn.softmax(h1 @ wg + bg, axis=-1)
    moe = jnp.zeros_like(h1)
    for e in range(N_EXPERTS):
        hdn = jax.nn.relu(h1 @ w1[e] + b1[e])
        moe = moe + gate[..., e:e + 1] * (hdn @ w2[e] + b2[e])
    return _ln(h1 + moe, g2, be2)


def _ref_encoder(src, frac, params, num_layers=N_LAYERS):
    fdiff = jnp.abs(frac[:, :, None] - frac[:, None, :])
    out = src
    for i in range(num_layers):
        out = _ref_layer(out, fdiff, params, add_frac_bias=(i == 0))
    return out


# --------------------------------- params ------------------------------------
def init_params(key):
    ks = jax.random.split(key, 20)
    nrm = lambda k, shape, s=0.1: (s * jax.random.normal(k, shape)).astype(jnp.float32)
    wq = nrm(ks[0], (D_MODEL, D_MODEL));  bq = nrm(ks[1], (1, D_MODEL), 0.05)
    wk = nrm(ks[2], (D_MODEL, D_MODEL));  bk = nrm(ks[3], (1, D_MODEL), 0.05)
    wv = nrm(ks[4], (D_MODEL, D_MODEL));  bv = nrm(ks[5], (1, D_MODEL), 0.05)
    wo = nrm(ks[6], (D_MODEL, D_MODEL));  bo = nrm(ks[7], (1, D_MODEL), 0.05)
    g1 = 1.0 + nrm(ks[8], (1, D_MODEL), 0.05); be1 = nrm(ks[9], (1, D_MODEL), 0.05)
    wg = nrm(ks[10], (D_MODEL, N_EXPERTS)); bg = nrm(ks[11], (1, N_EXPERTS), 0.05)
    w1 = nrm(ks[12], (N_EXPERTS, D_MODEL, D_FF)); b1 = nrm(ks[13], (N_EXPERTS, D_FF), 0.05)
    w2 = nrm(ks[14], (N_EXPERTS, D_FF, D_MODEL)); b2 = nrm(ks[15], (N_EXPERTS, D_MODEL), 0.05)
    g2 = 1.0 + nrm(ks[16], (1, D_MODEL), 0.05); be2 = nrm(ks[17], (1, D_MODEL), 0.05)
    return (wq, bq, wk, bk, wv, bv, wo, bo, g1, be1,
            wg, bg, w1, b1, w2, b2, g2, be2)


if __name__ == "__main__":
    key = jax.random.PRNGKey(0)
    k_src, k_frac, k_par = jax.random.split(key, 3)

    B, S = 2, 8
    src = jax.random.normal(k_src, (B, S, D_MODEL), dtype=jnp.float32)
    frac = jax.nn.softmax(jax.random.normal(k_frac, (B, S)), axis=-1).astype(jnp.float32)
    params = init_params(k_par)

    # One-time weight packing (outside the per-forward path).
    packed_w, packed_b = pack_params(params)
    packed_w, packed_b = jax.block_until_ready((packed_w, packed_b))

    out = jax.block_until_ready(
        encoder_moe_stoich(src, frac, packed_w, packed_b, num_layers=N_LAYERS))
    ref = jax.block_until_ready(_ref_encoder(src, frac, params, num_layers=N_LAYERS))

    assert out.shape == (B, S, D_MODEL)
    # Tolerance loosened vs. the pure-f32 reference because MXU operands are bf16
    # (f32 accumulation) and softmax uses the approximate EUP reciprocal.
    assert jnp.allclose(out, ref, rtol=3e-2, atol=3e-2), \
        f"max abs err {jnp.max(jnp.abs(out - ref))}"

    print("KERNEL_OK")
</pallas_src>

<mosaic_0001>
module attributes {stable_mosaic.version = 11 : i64} {
  func.func @_encoder_kernel(%arg0: memref<2x8x32xf32, #tpu.memory_space<vmem>>, %arg1: memref<2x1x8xf32, #tpu.memory_space<vmem>>, %arg2: memref<400x256xbf16, #tpu.memory_space<vmem>>, %arg3: memref<16x256xf32, #tpu.memory_space<vmem>>, %arg4: memref<2x8x32xf32, #tpu.memory_space<vmem>>) attributes {dimension_semantics = [], scalar_prefetch = 0 : i64, scratch_operands = 0 : i64, tpu.core_type = #tpu.core_type<tc>} {
    %c0 = arith.constant 0 : index
    %c0_0 = arith.constant 0 : index
    %0 = vector.load %arg2[%c0, %c0_0] : memref<400x256xbf16, #tpu.memory_space<vmem>>, vector<32x96xbf16>
    %c32 = arith.constant 32 : index
    %c0_1 = arith.constant 0 : index
    %1 = vector.load %arg2[%c32, %c0_1] : memref<400x256xbf16, #tpu.memory_space<vmem>>, vector<32x32xbf16>
    %c64 = arith.constant 64 : index
    %c0_2 = arith.constant 0 : index
    %2 = vector.load %arg2[%c64, %c0_2] : memref<400x256xbf16, #tpu.memory_space<vmem>>, vector<32x4xbf16>
    %c96 = arith.constant 96 : index
    %c0_3 = arith.constant 0 : index
    %3 = vector.load %arg2[%c96, %c0_3] : memref<400x256xbf16, #tpu.memory_space<vmem>>, vector<4x256xbf16>
    %c112 = arith.constant 112 : index
    %c0_4 = arith.constant 0 : index
    %4 = vector.load %arg2[%c112, %c0_4] : memref<400x256xbf16, #tpu.memory_space<vmem>>, vector<32x256xbf16>
    %c144 = arith.constant 144 : index
    %c0_5 = arith.constant 0 : index
    %5 = vector.load %arg2[%c144, %c0_5] : memref<400x256xbf16, #tpu.memory_space<vmem>>, vector<256x32xbf16>
    %c0_6 = arith.constant 0 : index
    %c0_7 = arith.constant 0 : index
    %6 = vector.load %arg3[%c0_6, %c0_7] : memref<16x256xf32, #tpu.memory_space<vmem>>, vector<1x96xf32>
    %c1 = arith.constant 1 : index
    %c0_8 = arith.constant 0 : index
    %7 = vector.load %arg3[%c1, %c0_8] : memref<16x256xf32, #tpu.memory_space<vmem>>, vector<1x32xf32>
    %c2 = arith.constant 2 : index
    %c0_9 = arith.constant 0 : index
    %8 = vector.load %arg3[%c2, %c0_9] : memref<16x256xf32, #tpu.memory_space<vmem>>, vector<1x32xf32>
    %c3 = arith.constant 3 : index
    %c0_10 = arith.constant 0 : index
    %9 = vector.load %arg3[%c3, %c0_10] : memref<16x256xf32, #tpu.memory_space<vmem>>, vector<1x32xf32>
    %c4 = arith.constant 4 : index
    %c0_11 = arith.constant 0 : index
    %10 = vector.load %arg3[%c4, %c0_11] : memref<16x256xf32, #tpu.memory_space<vmem>>, vector<1x4xf32>
    %c5 = arith.constant 5 : index
    %c0_12 = arith.constant 0 : index
    %11 = vector.load %arg3[%c5, %c0_12] : memref<16x256xf32, #tpu.memory_space<vmem>>, vector<1x256xf32>
    %c8 = arith.constant 8 : index
    %c0_13 = arith.constant 0 : index
    %12 = vector.load %arg3[%c8, %c0_13] : memref<16x256xf32, #tpu.memory_space<vmem>>, vector<4x32xf32>
    %c12 = arith.constant 12 : index
    %c0_14 = arith.constant 0 : index
    %13 = vector.load %arg3[%c12, %c0_14] : memref<16x256xf32, #tpu.memory_space<vmem>>, vector<1x32xf32>
    %c13 = arith.constant 13 : index
    %c0_15 = arith.constant 0 : index
    %14 = vector.load %arg3[%c13, %c0_15] : memref<16x256xf32, #tpu.memory_space<vmem>>, vector<1x32xf32>
    %c0_16 = arith.constant 0 : index
    %c0_17 = arith.constant 0 : index
    %c0_18 = arith.constant 0 : index
    %15 = vector.load %arg0[%c0_16, %c0_17, %c0_18] : memref<2x8x32xf32, #tpu.memory_space<vmem>>, vector<2x8x32xf32>
    %16 = vector.shape_cast %15 : vector<2x8x32xf32> to vector<16x32xf32>
    %c0_19 = arith.constant 0 : index
    %c0_20 = arith.constant 0 : index
    %c0_21 = arith.constant 0 : index
    %17 = vector.load %arg1[%c0_19, %c0_20, %c0_21] : memref<2x1x8xf32, #tpu.memory_space<vmem>>, vector<2x1x8xf32>
    %18 = tpu.transpose %17, [0, 2, 1] : vector<2x1x8xf32> -> vector<2x8x1xf32>
    %19 = vector.broadcast %18 : vector<2x8x1xf32> to vector<2x8x8xf32>
    %20 = vector.broadcast %17 : vector<2x1x8xf32> to vector<2x8x8xf32>
    %21 = arith.subf %19, %20 : vector<2x8x8xf32>
    %22 = math.absf %21 : vector<2x8x8xf32>
    %23 = arith.truncf %16 : vector<16x32xf32> to vector<16x32xbf16>
    %cst = arith.constant dense<0.000000e+00> : vector<16x96xf32>
    %24 = tpu.matmul %23, %0, %cst {dimension_numbers = #tpu.dot_dimension_numbers<[1], [0], [0], [1], [0, 0, 1, 1], [], []>} : vector<16x32xbf16>, vector<32x96xbf16>, vector<16x96xf32> -> vector<16x96xf32>
    %25 = vector.broadcast %6 : vector<1x96xf32> to vector<16x96xf32>
    %26 = arith.addf %24, %25 : vector<16x96xf32>
    %27 = arith.truncf %26 : vector<16x96xf32> to vector<16x96xbf16>
    %28 = vector.extract_strided_slice %27 {offsets = [0, 0], sizes = [16, 32], strides = [1, 1]} : vector<16x96xbf16> to vector<16x32xbf16>
    %29 = vector.shape_cast %28 : vector<16x32xbf16> to vector<2x8x32xbf16>
    %30 = vector.extract_strided_slice %27 {offsets = [0, 32], sizes = [16, 32], strides = [1, 1]} : vector<16x96xbf16> to vector<16x32xbf16>
    %31 = vector.shape_cast %30 : vector<16x32xbf16> to vector<2x8x32xbf16>
    %32 = vector.extract_strided_slice %27 {offsets = [0, 64], sizes = [16, 32], strides = [1, 1]} : vector<16x96xbf16> to vector<16x32xbf16>
    %33 = vector.shape_cast %32 : vector<16x32xbf16> to vector<2x8x32xbf16>
    %34 = vector.extract_strided_slice %29 {offsets = [0, 0, 0], sizes = [2, 8, 8], strides = [1, 1, 1]} : vector<2x8x32xbf16> to vector<2x8x8xbf16>
    %35 = vector.extract_strided_slice %31 {offsets = [0, 0, 0], sizes = [2, 8, 8], strides = [1, 1, 1]} : vector<2x8x32xbf16> to vector<2x8x8xbf16>
    "tpu.trace_start"() <{level = 10 : i32, message = "bqd,bkd->bqk"}> : () -> ()
    %cst_22 = arith.constant dense<0.000000e+00> : vector<2x8x8xf32>
    %36 = tpu.matmul %34, %35, %cst_22 {dimension_numbers = #tpu.dot_dimension_numbers<[2], [2], [1], [1], [0, 0, 0, 1, 1, 1], [0], [0]>} : vector<2x8x8xbf16>, vector<2x8x8xbf16>, vector<2x8x8xf32> -> vector<2x8x8xf32>
    "tpu.trace_stop"() : () -> ()
    %cst_23 = arith.constant 5.000000e-01 : f32
    %37 = vector.broadcast %cst_23 : f32 to vector<2x8x8xf32>
    %38 = arith.mulf %37, %22 : vector<2x8x8xf32>
    %39 = arith.subf %36, %38 : vector<2x8x8xf32>
    %cst_24 = arith.constant dense<0xFF800000> : vector<2x8xf32>
    %40 = vector.multi_reduction <maximumf>, %39, %cst_24 [2] : vector<2x8x8xf32> to vector<2x8xf32>
    %41 = vector.shape_cast %40 : vector<2x8xf32> to vector<2x8x1xf32>
    %42 = vector.broadcast %41 : vector<2x8x1xf32> to vector<2x8x8xf32>
    %43 = arith.subf %39, %42 : vector<2x8x8xf32>
    %44 = math.exp %43 : vector<2x8x8xf32>
    %cst_25 = arith.constant dense<0.000000e+00> : vector<2x8xf32>
    %45 = vector.multi_reduction <add>, %44, %cst_25 [2] : vector<2x8x8xf32> to vector<2x8xf32>
    %46 = vector.shape_cast %45 : vector<2x8xf32> to vector<2x8x1xf32>
    %47 = tpu.reciprocal %46 {approx = true} : vector<2x8x1xf32> -> vector<2x8x1xf32>
    %48 = vector.broadcast %47 : vector<2x8x1xf32> to vector<2x8x8xf32>
    %49 = arith.mulf %44, %48 : vector<2x8x8xf32>
    %50 = arith.truncf %49 : vector<2x8x8xf32> to vector<2x8x8xbf16>
    %51 = vector.extract_strided_slice %33 {offsets = [0, 0, 0], sizes = [2, 8, 8], strides = [1, 1, 1]} : vector<2x8x32xbf16> to vector<2x8x8xbf16>
    "tpu.trace_start"() <{level = 10 : i32, message = "bqk,bkd->bqd"}> : () -> ()
    %cst_26 = arith.constant dense<0.000000e+00> : vector<2x8x8xf32>
    %52 = tpu.matmul %50, %51, %cst_26 {dimension_numbers = #tpu.dot_dimension_numbers<[2], [1], [1], [2], [0, 0, 0, 1, 1, 2], [0], [0]>} : vector<2x8x8xbf16>, vector<2x8x8xbf16>, vector<2x8x8xf32> -> vector<2x8x8xf32>
    "tpu.trace_stop"() : () -> ()
    %53 = vector.extract_strided_slice %29 {offsets = [0, 0, 8], sizes = [2, 8, 8], strides = [1, 1, 1]} : vector<2x8x32xbf16> to vector<2x8x8xbf16>
    %54 = vector.extract_strided_slice %31 {offsets = [0, 0, 8], sizes = [2, 8, 8], strides = [1, 1, 1]} : vector<2x8x32xbf16> to vector<2x8x8xbf16>
    "tpu.trace_start"() <{level = 10 : i32, message = "bqd,bkd->bqk"}> : () -> ()
    %cst_27 = arith.constant dense<0.000000e+00> : vector<2x8x8xf32>
    %55 = tpu.matmul %53, %54, %cst_27 {dimension_numbers = #tpu.dot_dimension_numbers<[2], [2], [1], [1], [0, 0, 0, 1, 1, 1], [0], [0]>} : vector<2x8x8xbf16>, vector<2x8x8xbf16>, vector<2x8x8xf32> -> vector<2x8x8xf32>
    "tpu.trace_stop"() : () -> ()
    %cst_28 = arith.constant 2.500000e-01 : f32
    %56 = vector.broadcast %cst_28 : f32 to vector<2x8x8xf32>
    %57 = arith.mulf %56, %22 : vector<2x8x8xf32>
    %58 = arith.subf %55, %57 : vector<2x8x8xf32>
    %cst_29 = arith.constant dense<0xFF800000> : vector<2x8xf32>
    %59 = vector.multi_reduction <maximumf>, %58, %cst_29 [2] : vector<2x8x8xf32> to vector<2x8xf32>
    %60 = vector.shape_cast %59 : vector<2x8xf32> to vector<2x8x1xf32>
    %61 = vector.broadcast %60 : vector<2x8x1xf32> to vector<2x8x8xf32>
    %62 = arith.subf %58, %61 : vector<2x8x8xf32>
    %63 = math.exp %62 : vector<2x8x8xf32>
    %cst_30 = arith.constant dense<0.000000e+00> : vector<2x8xf32>
    %64 = vector.multi_reduction <add>, %63, %cst_30 [2] : vector<2x8x8xf32> to vector<2x8xf32>
    %65 = vector.shape_cast %64 : vector<2x8xf32> to vector<2x8x1xf32>
    %66 = tpu.reciprocal %65 {approx = true} : vector<2x8x1xf32> -> vector<2x8x1xf32>
    %67 = vector.broadcast %66 : vector<2x8x1xf32> to vector<2x8x8xf32>
    %68 = arith.mulf %63, %67 : vector<2x8x8xf32>
    %69 = arith.truncf %68 : vector<2x8x8xf32> to vector<2x8x8xbf16>
    %70 = vector.extract_strided_slice %33 {offsets = [0, 0, 8], sizes = [2, 8, 8], strides = [1, 1, 1]} : vector<2x8x32xbf16> to vector<2x8x8xbf16>
    "tpu.trace_start"() <{level = 10 : i32, message = "bqk,bkd->bqd"}> : () -> ()
    %cst_31 = arith.constant dense<0.000000e+00> : vector<2x8x8xf32>
    %71 = tpu.matmul %69, %70, %cst_31 {dimension_numbers = #tpu.dot_dimension_numbers<[2], [1], [1], [2], [0, 0, 0, 1, 1, 2], [0], [0]>} : vector<2x8x8xbf16>, vector<2x8x8xbf16>, vector<2x8x8xf32> -> vector<2x8x8xf32>
    "tpu.trace_stop"() : () -> ()
    %72 = vector.extract_strided_slice %29 {offsets = [0, 0, 16], sizes = [2, 8, 8], strides = [1, 1, 1]} : vector<2x8x32xbf16> to vector<2x8x8xbf16>
    %73 = vector.extract_strided_slice %31 {offsets = [0, 0, 16], sizes = [2, 8, 8], strides = [1, 1, 1]} : vector<2x8x32xbf16> to vector<2x8x8xbf16>
    "tpu.trace_start"() <{level = 10 : i32, message = "bqd,bkd->bqk"}> : () -> ()
    %cst_32 = arith.constant dense<0.000000e+00> : vector<2x8x8xf32>
    %74 = tpu.matmul %72, %73, %cst_32 {dimension_numbers = #tpu.dot_dimension_numbers<[2], [2], [1], [1], [0, 0, 0, 1, 1, 1], [0], [0]>} : vector<2x8x8xbf16>, vector<2x8x8xbf16>, vector<2x8x8xf32> -> vector<2x8x8xf32>
    "tpu.trace_stop"() : () -> ()
    %cst_33 = arith.constant 1.250000e-01 : f32
    %75 = vector.broadcast %cst_33 : f32 to vector<2x8x8xf32>
    %76 = arith.mulf %75, %22 : vector<2x8x8xf32>
    %77 = arith.subf %74, %76 : vector<2x8x8xf32>
    %cst_34 = arith.constant dense<0xFF800000> : vector<2x8xf32>
    %78 = vector.multi_reduction <maximumf>, %77, %cst_34 [2] : vector<2x8x8xf32> to vector<2x8xf32>
    %79 = vector.shape_cast %78 : vector<2x8xf32> to vector<2x8x1xf32>
    %80 = vector.broadcast %79 : vector<2x8x1xf32> to vector<2x8x8xf32>
    %81 = arith.subf %77, %80 : vector<2x8x8xf32>
    %82 = math.exp %81 : vector<2x8x8xf32>
    %cst_35 = arith.constant dense<0.000000e+00> : vector<2x8xf32>
    %83 = vector.multi_reduction <add>, %82, %cst_35 [2] : vector<2x8x8xf32> to vector<2x8xf32>
    %84 = vector.shape_cast %83 : vector<2x8xf32> to vector<2x8x1xf32>
    %85 = tpu.reciprocal %84 {approx = true} : vector<2x8x1xf32> -> vector<2x8x1xf32>
    %86 = vector.broadcast %85 : vector<2x8x1xf32> to vector<2x8x8xf32>
    %87 = arith.mulf %82, %86 : vector<2x8x8xf32>
    %88 = arith.truncf %87 : vector<2x8x8xf32> to vector<2x8x8xbf16>
    %89 = vector.extract_strided_slice %33 {offsets = [0, 0, 16], sizes = [2, 8, 8], strides = [1, 1, 1]} : vector<2x8x32xbf16> to vector<2x8x8xbf16>
    "tpu.trace_start"() <{level = 10 : i32, message = "bqk,bkd->bqd"}> : () -> ()
    %cst_36 = arith.constant dense<0.000000e+00> : vector<2x8x8xf32>
    %90 = tpu.matmul %88, %89, %cst_36 {dimension_numbers = #tpu.dot_dimension_numbers<[2], [1], [1], [2], [0, 0, 0, 1, 1, 2], [0], [0]>} : vector<2x8x8xbf16>, vector<2x8x8xbf16>, vector<2x8x8xf32> -> vector<2x8x8xf32>
    "tpu.trace_stop"() : () -> ()
    %91 = vector.extract_strided_slice %29 {offsets = [0, 0, 24], sizes = [2, 8, 8], strides = [1, 1, 1]} : vector<2x8x32xbf16> to vector<2x8x8xbf16>
    %92 = vector.extract_strided_slice %31 {offsets = [0, 0, 24], sizes = [2, 8, 8], strides = [1, 1, 1]} : vector<2x8x32xbf16> to vector<2x8x8xbf16>
    "tpu.trace_start"() <{level = 10 : i32, message = "bqd,bkd->bqk"}> : () -> ()
    %cst_37 = arith.constant dense<0.000000e+00> : vector<2x8x8xf32>
    %93 = tpu.matmul %91, %92, %cst_37 {dimension_numbers = #tpu.dot_dimension_numbers<[2], [2], [1], [1], [0, 0, 0, 1, 1, 1], [0], [0]>} : vector<2x8x8xbf16>, vector<2x8x8xbf16>, vector<2x8x8xf32> -> vector<2x8x8xf32>
    "tpu.trace_stop"() : () -> ()
    %cst_38 = arith.constant 6.250000e-02 : f32
    %94 = vector.broadcast %cst_38 : f32 to vector<2x8x8xf32>
    %95 = arith.mulf %94, %22 : vector<2x8x8xf32>
    %96 = arith.subf %93, %95 : vector<2x8x8xf32>
    %cst_39 = arith.constant dense<0xFF800000> : vector<2x8xf32>
    %97 = vector.multi_reduction <maximumf>, %96, %cst_39 [2] : vector<2x8x8xf32> to vector<2x8xf32>
    %98 = vector.shape_cast %97 : vector<2x8xf32> to vector<2x8x1xf32>
    %99 = vector.broadcast %98 : vector<2x8x1xf32> to vector<2x8x8xf32>
    %100 = arith.subf %96, %99 : vector<2x8x8xf32>
    %101 = math.exp %100 : vector<2x8x8xf32>
    %cst_40 = arith.constant dense<0.000000e+00> : vector<2x8xf32>
    %102 = vector.multi_reduction <add>, %101, %cst_40 [2] : vector<2x8x8xf32> to vector<2x8xf32>
    %103 = vector.shape_cast %102 : vector<2x8xf32> to vector<2x8x1xf32>
    %104 = tpu.reciprocal %103 {approx = true} : vector<2x8x1xf32> -> vector<2x8x1xf32>
    %105 = vector.broadcast %104 : vector<2x8x1xf32> to vector<2x8x8xf32>
    %106 = arith.mulf %101, %105 : vector<2x8x8xf32>
    %107 = arith.truncf %106 : vector<2x8x8xf32> to vector<2x8x8xbf16>
    %108 = vector.extract_strided_slice %33 {offsets = [0, 0, 24], sizes = [2, 8, 8], strides = [1, 1, 1]} : vector<2x8x32xbf16> to vector<2x8x8xbf16>
    "tpu.trace_start"() <{level = 10 : i32, message = "bqk,bkd->bqd"}> : () -> ()
    %cst_41 = arith.constant dense<0.000000e+00> : vector<2x8x8xf32>
    %109 = tpu.matmul %107, %108, %cst_41 {dimension_numbers = #tpu.dot_dimension_numbers<[2], [1], [1], [2], [0, 0, 0, 1, 1, 2], [0], [0]>} : vector<2x8x8xbf16>, vector<2x8x8xbf16>, vector<2x8x8xf32> -> vector<2x8x8xf32>
    "tpu.trace_stop"() : () -> ()
    %110 = tpu.concatenate %52, %71, %90, %109 in 2 : vector<2x8x8xf32>, vector<2x8x8xf32>, vector<2x8x8xf32>, vector<2x8x8xf32> -> vector<2x8x32xf32>
    %111 = vector.shape_cast %110 : vector<2x8x32xf32> to vector<16x32xf32>
    %112 = arith.truncf %111 : vector<16x32xf32> to vector<16x32xbf16>
    %cst_42 = arith.constant dense<0.000000e+00> : vector<16x32xf32>
    %113 = tpu.matmul %112, %1, %cst_42 {dimension_numbers = #tpu.dot_dimension_numbers<[1], [0], [0], [1], [0, 0, 1, 1], [], []>} : vector<16x32xbf16>, vector<32x32xbf16>, vector<16x32xf32> -> vector<16x32xf32>
    %114 = vector.broadcast %7 : vector<1x32xf32> to vector<16x32xf32>
    %115 = arith.addf %113, %114 : vector<16x32xf32>
    %116 = arith.addf %16, %115 : vector<16x32xf32>
    %cst_43 = arith.constant dense<0.000000e+00> : vector<16xf32>
    %117 = vector.multi_reduction <add>, %116, %cst_43 [1] : vector<16x32xf32> to vector<16xf32>
    %118 = vector.shape_cast %117 : vector<16xf32> to vector<16x1xf32>
    %cst_44 = arith.constant 3.200000e+01 : f32
    %119 = vector.broadcast %cst_44 : f32 to vector<16x1xf32>
    %120 = arith.divf %118, %119 : vector<16x1xf32>
    %121 = vector.broadcast %120 : vector<16x1xf32> to vector<16x32xf32>
    %122 = arith.subf %116, %121 : vector<16x32xf32>
    %123 = arith.mulf %122, %122 : vector<16x32xf32>
    %cst_45 = arith.constant dense<0.000000e+00> : vector<16xf32>
    %124 = vector.multi_reduction <add>, %123, %cst_45 [1] : vector<16x32xf32> to vector<16xf32>
    %125 = vector.shape_cast %124 : vector<16xf32> to vector<16x1xf32>
    %cst_46 = arith.constant 3.200000e+01 : f32
    %126 = vector.broadcast %cst_46 : f32 to vector<16x1xf32>
    %127 = arith.divf %125, %126 : vector<16x1xf32>
    %128 = vector.broadcast %120 : vector<16x1xf32> to vector<16x32xf32>
    %129 = arith.subf %116, %128 : vector<16x32xf32>
    %cst_47 = arith.constant 9.99999974E-6 : f32
    %130 = vector.broadcast %cst_47 : f32 to vector<16x1xf32>
    %131 = arith.addf %127, %130 : vector<16x1xf32>
    %132 = math.rsqrt %131 : vector<16x1xf32>
    %133 = vector.broadcast %132 : vector<16x1xf32> to vector<16x32xf32>
    %134 = arith.mulf %129, %133 : vector<16x32xf32>
    %135 = vector.broadcast %8 : vector<1x32xf32> to vector<16x32xf32>
    %136 = arith.mulf %134, %135 : vector<16x32xf32>
    %137 = vector.broadcast %9 : vector<1x32xf32> to vector<16x32xf32>
    %138 = arith.addf %136, %137 : vector<16x32xf32>
    %139 = arith.truncf %138 : vector<16x32xf32> to vector<16x32xbf16>
    %cst_48 = arith.constant dense<0.000000e+00> : vector<16x4xf32>
    %140 = tpu.matmul %139, %2, %cst_48 {dimension_numbers = #tpu.dot_dimension_numbers<[1], [0], [0], [1], [0, 0, 1, 1], [], []>} : vector<16x32xbf16>, vector<32x4xbf16>, vector<16x4xf32> -> vector<16x4xf32>
    %141 = vector.broadcast %10 : vector<1x4xf32> to vector<16x4xf32>
    %142 = arith.addf %140, %141 : vector<16x4xf32>
    %cst_49 = arith.constant dense<0xFF800000> : vector<16xf32>
    %143 = vector.multi_reduction <maximumf>, %142, %cst_49 [1] : vector<16x4xf32> to vector<16xf32>
    %144 = vector.shape_cast %143 : vector<16xf32> to vector<16x1xf32>
    %145 = vector.broadcast %144 : vector<16x1xf32> to vector<16x4xf32>
    %146 = arith.subf %142, %145 : vector<16x4xf32>
    %147 = math.exp %146 : vector<16x4xf32>
    %cst_50 = arith.constant dense<0.000000e+00> : vector<16xf32>
    %148 = vector.multi_reduction <add>, %147, %cst_50 [1] : vector<16x4xf32> to vector<16xf32>
    %149 = vector.shape_cast %148 : vector<16xf32> to vector<16x1xf32>
    %150 = tpu.reciprocal %149 {approx = true} : vector<16x1xf32> -> vector<16x1xf32>
    %151 = vector.broadcast %150 : vector<16x1xf32> to vector<16x4xf32>
    %152 = arith.mulf %147, %151 : vector<16x4xf32>
    %cst_51 = arith.constant dense<0.000000e+00> : vector<16x256xf32>
    %153 = tpu.matmul %139, %4, %cst_51 {dimension_numbers = #tpu.dot_dimension_numbers<[1], [0], [0], [1], [0, 0, 1, 1], [], []>} : vector<16x32xbf16>, vector<32x256xbf16>, vector<16x256xf32> -> vector<16x256xf32>
    %154 = vector.broadcast %11 : vector<1x256xf32> to vector<16x256xf32>
    %155 = arith.addf %153, %154 : vector<16x256xf32>
    %cst_52 = arith.constant 0.000000e+00 : f32
    %156 = vector.broadcast %cst_52 : f32 to vector<16x256xf32>
    %157 = arith.maximumf %155, %156 : vector<16x256xf32>
    %158 = arith.truncf %152 : vector<16x4xf32> to vector<16x4xbf16>
    %cst_53 = arith.constant dense<0.000000e+00> : vector<16x256xf32>
    %159 = tpu.matmul %158, %3, %cst_53 {dimension_numbers = #tpu.dot_dimension_numbers<[1], [0], [0], [1], [0, 0, 1, 1], [], []>} : vector<16x4xbf16>, vector<4x256xbf16>, vector<16x256xf32> -> vector<16x256xf32>
    %160 = arith.mulf %157, %159 : vector<16x256xf32>
    %161 = arith.truncf %160 : vector<16x256xf32> to vector<16x256xbf16>
    %cst_54 = arith.constant dense<0.000000e+00> : vector<16x32xf32>
    %162 = tpu.matmul %161, %5, %cst_54 {dimension_numbers = #tpu.dot_dimension_numbers<[1], [0], [0], [1], [0, 0, 1, 1], [], []>} : vector<16x256xbf16>, vector<256x32xbf16>, vector<16x32xf32> -> vector<16x32xf32>
    %cst_55 = arith.constant dense<0.000000e+00> : vector<16x32xf32>
    %163 = tpu.matmul %152, %12, %cst_55 {dimension_numbers = #tpu.dot_dimension_numbers<[1], [0], [0], [1], [0, 0, 1, 1], [], []>} : vector<16x4xf32>, vector<4x32xf32>, vector<16x32xf32> -> vector<16x32xf32>
    %164 = arith.addf %162, %163 : vector<16x32xf32>
    %165 = arith.addf %138, %164 : vector<16x32xf32>
    %cst_56 = arith.constant dense<0.000000e+00> : vector<16xf32>
    %166 = vector.multi_reduction <add>, %165, %cst_56 [1] : vector<16x32xf32> to vector<16xf32>
    %167 = vector.shape_cast %166 : vector<16xf32> to vector<16x1xf32>
    %cst_57 = arith.constant 3.200000e+01 : f32
    %168 = vector.broadcast %cst_57 : f32 to vector<16x1xf32>
    %169 = arith.divf %167, %168 : vector<16x1xf32>
    %170 = vector.broadcast %169 : vector<16x1xf32> to vector<16x32xf32>
    %171 = arith.subf %165, %170 : vector<16x32xf32>
    %172 = arith.mulf %171, %171 : vector<16x32xf32>
    %cst_58 = arith.constant dense<0.000000e+00> : vector<16xf32>
    %173 = vector.multi_reduction <add>, %172, %cst_58 [1] : vector<16x32xf32> to vector<16xf32>
    %174 = vector.shape_cast %173 : vector<16xf32> to vector<16x1xf32>
    %cst_59 = arith.constant 3.200000e+01 : f32
    %175 = vector.broadcast %cst_59 : f32 to vector<16x1xf32>
    %176 = arith.divf %174, %175 : vector<16x1xf32>
    %177 = vector.broadcast %169 : vector<16x1xf32> to vector<16x32xf32>
    %178 = arith.subf %165, %177 : vector<16x32xf32>
    %cst_60 = arith.constant 9.99999974E-6 : f32
    %179 = vector.broadcast %cst_60 : f32 to vector<16x1xf32>
    %180 = arith.addf %176, %179 : vector<16x1xf32>
    %181 = math.rsqrt %180 : vector<16x1xf32>
    %182 = vector.broadcast %181 : vector<16x1xf32> to vector<16x32xf32>
    %183 = arith.mulf %178, %182 : vector<16x32xf32>
    %184 = vector.broadcast %13 : vector<1x32xf32> to vector<16x32xf32>
    %185 = arith.mulf %183, %184 : vector<16x32xf32>
    %186 = vector.broadcast %14 : vector<1x32xf32> to vector<16x32xf32>
    %187 = arith.addf %185, %186 : vector<16x32xf32>
    %188 = arith.truncf %187 : vector<16x32xf32> to vector<16x32xbf16>
    %cst_61 = arith.constant dense<0.000000e+00> : vector<16x96xf32>
    %189 = tpu.matmul %188, %0, %cst_61 {dimension_numbers = #tpu.dot_dimension_numbers<[1], [0], [0], [1], [0, 0, 1, 1], [], []>} : vector<16x32xbf16>, vector<32x96xbf16>, vector<16x96xf32> -> vector<16x96xf32>
    %190 = vector.broadcast %6 : vector<1x96xf32> to vector<16x96xf32>
    %191 = arith.addf %189, %190 : vector<16x96xf32>
    %192 = arith.truncf %191 : vector<16x96xf32> to vector<16x96xbf16>
    %193 = vector.extract_strided_slice %192 {offsets = [0, 0], sizes = [16, 32], strides = [1, 1]} : vector<16x96xbf16> to vector<16x32xbf16>
    %194 = vector.shape_cast %193 : vector<16x32xbf16> to vector<2x8x32xbf16>
    %195 = vector.extract_strided_slice %192 {offsets = [0, 32], sizes = [16, 32], strides = [1, 1]} : vector<16x96xbf16> to vector<16x32xbf16>
    %196 = vector.shape_cast %195 : vector<16x32xbf16> to vector<2x8x32xbf16>
    %197 = vector.extract_strided_slice %192 {offsets = [0, 64], sizes = [16, 32], strides = [1, 1]} : vector<16x96xbf16> to vector<16x32xbf16>
    %198 = vector.shape_cast %197 : vector<16x32xbf16> to vector<2x8x32xbf16>
    %199 = vector.extract_strided_slice %194 {offsets = [0, 0, 0], sizes = [2, 8, 8], strides = [1, 1, 1]} : vector<2x8x32xbf16> to vector<2x8x8xbf16>
    %200 = vector.extract_strided_slice %196 {offsets = [0, 0, 0], sizes = [2, 8, 8], strides = [1, 1, 1]} : vector<2x8x32xbf16> to vector<2x8x8xbf16>
    "tpu.trace_start"() <{level = 10 : i32, message = "bqd,bkd->bqk"}> : () -> ()
    %cst_62 = arith.constant dense<0.000000e+00> : vector<2x8x8xf32>
    %201 = tpu.matmul %199, %200, %cst_62 {dimension_numbers = #tpu.dot_dimension_numbers<[2], [2], [1], [1], [0, 0, 0, 1, 1, 1], [0], [0]>} : vector<2x8x8xbf16>, vector<2x8x8xbf16>, vector<2x8x8xf32> -> vector<2x8x8xf32>
    "tpu.trace_stop"() : () -> ()
    %cst_63 = arith.constant dense<0xFF800000> : vector<2x8xf32>
    %202 = vector.multi_reduction <maximumf>, %201, %cst_63 [2] : vector<2x8x8xf32> to vector<2x8xf32>
    %203 = vector.shape_cast %202 : vector<2x8xf32> to vector<2x8x1xf32>
    %204 = vector.broadcast %203 : vector<2x8x1xf32> to vector<2x8x8xf32>
    %205 = arith.subf %201, %204 : vector<2x8x8xf32>
    %206 = math.exp %205 : vector<2x8x8xf32>
    %cst_64 = arith.constant dense<0.000000e+00> : vector<2x8xf32>
    %207 = vector.multi_reduction <add>, %206, %cst_64 [2] : vector<2x8x8xf32> to vector<2x8xf32>
    %208 = vector.shape_cast %207 : vector<2x8xf32> to vector<2x8x1xf32>
    %209 = tpu.reciprocal %208 {approx = true} : vector<2x8x1xf32> -> vector<2x8x1xf32>
    %210 = vector.broadcast %209 : vector<2x8x1xf32> to vector<2x8x8xf32>
    %211 = arith.mulf %206, %210 : vector<2x8x8xf32>
    %212 = arith.truncf %211 : vector<2x8x8xf32> to vector<2x8x8xbf16>
    %213 = vector.extract_strided_slice %198 {offsets = [0, 0, 0], sizes = [2, 8, 8], strides = [1, 1, 1]} : vector<2x8x32xbf16> to vector<2x8x8xbf16>
    "tpu.trace_start"() <{level = 10 : i32, message = "bqk,bkd->bqd"}> : () -> ()
    %cst_65 = arith.constant dense<0.000000e+00> : vector<2x8x8xf32>
    %214 = tpu.matmul %212, %213, %cst_65 {dimension_numbers = #tpu.dot_dimension_numbers<[2], [1], [1], [2], [0, 0, 0, 1, 1, 2], [0], [0]>} : vector<2x8x8xbf16>, vector<2x8x8xbf16>, vector<2x8x8xf32> -> vector<2x8x8xf32>
    "tpu.trace_stop"() : () -> ()
    %215 = vector.extract_strided_slice %194 {offsets = [0, 0, 8], sizes = [2, 8, 8], strides = [1, 1, 1]} : vector<2x8x32xbf16> to vector<2x8x8xbf16>
    %216 = vector.extract_strided_slice %196 {offsets = [0, 0, 8], sizes = [2, 8, 8], strides = [1, 1, 1]} : vector<2x8x32xbf16> to vector<2x8x8xbf16>
    "tpu.trace_start"() <{level = 10 : i32, message = "bqd,bkd->bqk"}> : () -> ()
    %cst_66 = arith.constant dense<0.000000e+00> : vector<2x8x8xf32>
    %217 = tpu.matmul %215, %216, %cst_66 {dimension_numbers = #tpu.dot_dimension_numbers<[2], [2], [1], [1], [0, 0, 0, 1, 1, 1], [0], [0]>} : vector<2x8x8xbf16>, vector<2x8x8xbf16>, vector<2x8x8xf32> -> vector<2x8x8xf32>
    "tpu.trace_stop"() : () -> ()
    %cst_67 = arith.constant dense<0xFF800000> : vector<2x8xf32>
    %218 = vector.multi_reduction <maximumf>, %217, %cst_67 [2] : vector<2x8x8xf32> to vector<2x8xf32>
    %219 = vector.shape_cast %218 : vector<2x8xf32> to vector<2x8x1xf32>
    %220 = vector.broadcast %219 : vector<2x8x1xf32> to vector<2x8x8xf32>
    %221 = arith.subf %217, %220 : vector<2x8x8xf32>
    %222 = math.exp %221 : vector<2x8x8xf32>
    %cst_68 = arith.constant dense<0.000000e+00> : vector<2x8xf32>
    %223 = vector.multi_reduction <add>, %222, %cst_68 [2] : vector<2x8x8xf32> to vector<2x8xf32>
    %224 = vector.shape_cast %223 : vector<2x8xf32> to vector<2x8x1xf32>
    %225 = tpu.reciprocal %224 {approx = true} : vector<2x8x1xf32> -> vector<2x8x1xf32>
    %226 = vector.broadcast %225 : vector<2x8x1xf32> to vector<2x8x8xf32>
    %227 = arith.mulf %222, %226 : vector<2x8x8xf32>
    %228 = arith.truncf %227 : vector<2x8x8xf32> to vector<2x8x8xbf16>
    %229 = vector.extract_strided_slice %198 {offsets = [0, 0, 8], sizes = [2, 8, 8], strides = [1, 1, 1]} : vector<2x8x32xbf16> to vector<2x8x8xbf16>
    "tpu.trace_start"() <{level = 10 : i32, message = "bqk,bkd->bqd"}> : () -> ()
    %cst_69 = arith.constant dense<0.000000e+00> : vector<2x8x8xf32>
    %230 = tpu.matmul %228, %229, %cst_69 {dimension_numbers = #tpu.dot_dimension_numbers<[2], [1], [1], [2], [0, 0, 0, 1, 1, 2], [0], [0]>} : vector<2x8x8xbf16>, vector<2x8x8xbf16>, vector<2x8x8xf32> -> vector<2x8x8xf32>
    "tpu.trace_stop"() : () -> ()
    %231 = vector.extract_strided_slice %194 {offsets = [0, 0, 16], sizes = [2, 8, 8], strides = [1, 1, 1]} : vector<2x8x32xbf16> to vector<2x8x8xbf16>
    %232 = vector.extract_strided_slice %196 {offsets = [0, 0, 16], sizes = [2, 8, 8], strides = [1, 1, 1]} : vector<2x8x32xbf16> to vector<2x8x8xbf16>
    "tpu.trace_start"() <{level = 10 : i32, message = "bqd,bkd->bqk"}> : () -> ()
    %cst_70 = arith.constant dense<0.000000e+00> : vector<2x8x8xf32>
    %233 = tpu.matmul %231, %232, %cst_70 {dimension_numbers = #tpu.dot_dimension_numbers<[2], [2], [1], [1], [0, 0, 0, 1, 1, 1], [0], [0]>} : vector<2x8x8xbf16>, vector<2x8x8xbf16>, vector<2x8x8xf32> -> vector<2x8x8xf32>
    "tpu.trace_stop"() : () -> ()
    %cst_71 = arith.constant dense<0xFF800000> : vector<2x8xf32>
    %234 = vector.multi_reduction <maximumf>, %233, %cst_71 [2] : vector<2x8x8xf32> to vector<2x8xf32>
    %235 = vector.shape_cast %234 : vector<2x8xf32> to vector<2x8x1xf32>
    %236 = vector.broadcast %235 : vector<2x8x1xf32> to vector<2x8x8xf32>
    %237 = arith.subf %233, %236 : vector<2x8x8xf32>
    %238 = math.exp %237 : vector<2x8x8xf32>
    %cst_72 = arith.constant dense<0.000000e+00> : vector<2x8xf32>
    %239 = vector.multi_reduction <add>, %238, %cst_72 [2] : vector<2x8x8xf32> to vector<2x8xf32>
    %240 = vector.shape_cast %239 : vector<2x8xf32> to vector<2x8x1xf32>
    %241 = tpu.reciprocal %240 {approx = true} : vector<2x8x1xf32> -> vector<2x8x1xf32>
    %242 = vector.broadcast %241 : vector<2x8x1xf32> to vector<2x8x8xf32>
    %243 = arith.mulf %238, %242 : vector<2x8x8xf32>
    %244 = arith.truncf %243 : vector<2x8x8xf32> to vector<2x8x8xbf16>
    %245 = vector.extract_strided_slice %198 {offsets = [0, 0, 16], sizes = [2, 8, 8], strides = [1, 1, 1]} : vector<2x8x32xbf16> to vector<2x8x8xbf16>
    "tpu.trace_start"() <{level = 10 : i32, message = "bqk,bkd->bqd"}> : () -> ()
    %cst_73 = arith.constant dense<0.000000e+00> : vector<2x8x8xf32>
    %246 = tpu.matmul %244, %245, %cst_73 {dimension_numbers = #tpu.dot_dimension_numbers<[2], [1], [1], [2], [0, 0, 0, 1, 1, 2], [0], [0]>} : vector<2x8x8xbf16>, vector<2x8x8xbf16>, vector<2x8x8xf32> -> vector<2x8x8xf32>
    "tpu.trace_stop"() : () -> ()
    %247 = vector.extract_strided_slice %194 {offsets = [0, 0, 24], sizes = [2, 8, 8], strides = [1, 1, 1]} : vector<2x8x32xbf16> to vector<2x8x8xbf16>
    %248 = vector.extract_strided_slice %196 {offsets = [0, 0, 24], sizes = [2, 8, 8], strides = [1, 1, 1]} : vector<2x8x32xbf16> to vector<2x8x8xbf16>
    "tpu.trace_start"() <{level = 10 : i32, message = "bqd,bkd->bqk"}> : () -> ()
    %cst_74 = arith.constant dense<0.000000e+00> : vector<2x8x8xf32>
    %249 = tpu.matmul %247, %248, %cst_74 {dimension_numbers = #tpu.dot_dimension_numbers<[2], [2], [1], [1], [0, 0, 0, 1, 1, 1], [0], [0]>} : vector<2x8x8xbf16>, vector<2x8x8xbf16>, vector<2x8x8xf32> -> vector<2x8x8xf32>
    "tpu.trace_stop"() : () -> ()
    %cst_75 = arith.constant dense<0xFF800000> : vector<2x8xf32>
    %250 = vector.multi_reduction <maximumf>, %249, %cst_75 [2] : vector<2x8x8xf32> to vector<2x8xf32>
    %251 = vector.shape_cast %250 : vector<2x8xf32> to vector<2x8x1xf32>
    %252 = vector.broadcast %251 : vector<2x8x1xf32> to vector<2x8x8xf32>
    %253 = arith.subf %249, %252 : vector<2x8x8xf32>
    %254 = math.exp %253 : vector<2x8x8xf32>
    %cst_76 = arith.constant dense<0.000000e+00> : vector<2x8xf32>
    %255 = vector.multi_reduction <add>, %254, %cst_76 [2] : vector<2x8x8xf32> to vector<2x8xf32>
    %256 = vector.shape_cast %255 : vector<2x8xf32> to vector<2x8x1xf32>
    %257 = tpu.reciprocal %256 {approx = true} : vector<2x8x1xf32> -> vector<2x8x1xf32>
    %258 = vector.broadcast %257 : vector<2x8x1xf32> to vector<2x8x8xf32>
    %259 = arith.mulf %254, %258 : vector<2x8x8xf32>
    %260 = arith.truncf %259 : vector<2x8x8xf32> to vector<2x8x8xbf16>
    %261 = vector.extract_strided_slice %198 {offsets = [0, 0, 24], sizes = [2, 8, 8], strides = [1, 1, 1]} : vector<2x8x32xbf16> to vector<2x8x8xbf16>
    "tpu.trace_start"() <{level = 10 : i32, message = "bqk,bkd->bqd"}> : () -> ()
    %cst_77 = arith.constant dense<0.000000e+00> : vector<2x8x8xf32>
    %262 = tpu.matmul %260, %261, %cst_77 {dimension_numbers = #tpu.dot_dimension_numbers<[2], [1], [1], [2], [0, 0, 0, 1, 1, 2], [0], [0]>} : vector<2x8x8xbf16>, vector<2x8x8xbf16>, vector<2x8x8xf32> -> vector<2x8x8xf32>
    "tpu.trace_stop"() : () -> ()
    %263 = tpu.concatenate %214, %230, %246, %262 in 2 : vector<2x8x8xf32>, vector<2x8x8xf32>, vector<2x8x8xf32>, vector<2x8x8xf32> -> vector<2x8x32xf32>
    %264 = vector.shape_cast %263 : vector<2x8x32xf32> to vector<16x32xf32>
    %265 = arith.truncf %264 : vector<16x32xf32> to vector<16x32xbf16>
    %cst_78 = arith.constant dense<0.000000e+00> : vector<16x32xf32>
    %266 = tpu.matmul %265, %1, %cst_78 {dimension_numbers = #tpu.dot_dimension_numbers<[1], [0], [0], [1], [0, 0, 1, 1], [], []>} : vector<16x32xbf16>, vector<32x32xbf16>, vector<16x32xf32> -> vector<16x32xf32>
    %267 = vector.broadcast %7 : vector<1x32xf32> to vector<16x32xf32>
    %268 = arith.addf %266, %267 : vector<16x32xf32>
    %269 = arith.addf %187, %268 : vector<16x32xf32>
    %cst_79 = arith.constant dense<0.000000e+00> : vector<16xf32>
    %270 = vector.multi_reduction <add>, %269, %cst_79 [1] : vector<16x32xf32> to vector<16xf32>
    %271 = vector.shape_cast %270 : vector<16xf32> to vector<16x1xf32>
    %cst_80 = arith.constant 3.200000e+01 : f32
    %272 = vector.broadcast %cst_80 : f32 to vector<16x1xf32>
    %273 = arith.divf %271, %272 : vector<16x1xf32>
    %274 = vector.broadcast %273 : vector<16x1xf32> to vector<16x32xf32>
    %275 = arith.subf %269, %274 : vector<16x32xf32>
    %276 = arith.mulf %275, %275 : vector<16x32xf32>
    %cst_81 = arith.constant dense<0.000000e+00> : vector<16xf32>
    %277 = vector.multi_reduction <add>, %276, %cst_81 [1] : vector<16x32xf32> to vector<16xf32>
    %278 = vector.shape_cast %277 : vector<16xf32> to vector<16x1xf32>
    %cst_82 = arith.constant 3.200000e+01 : f32
    %279 = vector.broadcast %cst_82 : f32 to vector<16x1xf32>
    %280 = arith.divf %278, %279 : vector<16x1xf32>
    %281 = vector.broadcast %273 : vector<16x1xf32> to vector<16x32xf32>
    %282 = arith.subf %269, %281 : vector<16x32xf32>
    %cst_83 = arith.constant 9.99999974E-6 : f32
    %283 = vector.broadcast %cst_83 : f32 to vector<16x1xf32>
    %284 = arith.addf %280, %283 : vector<16x1xf32>
    %285 = math.rsqrt %284 : vector<16x1xf32>
    %286 = vector.broadcast %285 : vector<16x1xf32> to vector<16x32xf32>
    %287 = arith.mulf %282, %286 : vector<16x32xf32>
    %288 = vector.broadcast %8 : vector<1x32xf32> to vector<16x32xf32>
    %289 = arith.mulf %287, %288 : vector<16x32xf32>
    %290 = vector.broadcast %9 : vector<1x32xf32> to vector<16x32xf32>
    %291 = arith.addf %289, %290 : vector<16x32xf32>
    %292 = arith.truncf %291 : vector<16x32xf32> to vector<16x32xbf16>
    %cst_84 = arith.constant dense<0.000000e+00> : vector<16x4xf32>
    %293 = tpu.matmul %292, %2, %cst_84 {dimension_numbers = #tpu.dot_dimension_numbers<[1], [0], [0], [1], [0, 0, 1, 1], [], []>} : vector<16x32xbf16>, vector<32x4xbf16>, vector<16x4xf32> -> vector<16x4xf32>
    %294 = vector.broadcast %10 : vector<1x4xf32> to vector<16x4xf32>
    %295 = arith.addf %293, %294 : vector<16x4xf32>
    %cst_85 = arith.constant dense<0xFF800000> : vector<16xf32>
    %296 = vector.multi_reduction <maximumf>, %295, %cst_85 [1] : vector<16x4xf32> to vector<16xf32>
    %297 = vector.shape_cast %296 : vector<16xf32> to vector<16x1xf32>
    %298 = vector.broadcast %297 : vector<16x1xf32> to vector<16x4xf32>
    %299 = arith.subf %295, %298 : vector<16x4xf32>
    %300 = math.exp %299 : vector<16x4xf32>
    %cst_86 = arith.constant dense<0.000000e+00> : vector<16xf32>
    %301 = vector.multi_reduction <add>, %300, %cst_86 [1] : vector<16x4xf32> to vector<16xf32>
    %302 = vector.shape_cast %301 : vector<16xf32> to vector<16x1xf32>
    %303 = tpu.reciprocal %302 {approx = true} : vector<16x1xf32> -> vector<16x1xf32>
    %304 = vector.broadcast %303 : vector<16x1xf32> to vector<16x4xf32>
    %305 = arith.mulf %300, %304 : vector<16x4xf32>
    %cst_87 = arith.constant dense<0.000000e+00> : vector<16x256xf32>
    %306 = tpu.matmul %292, %4, %cst_87 {dimension_numbers = #tpu.dot_dimension_numbers<[1], [0], [0], [1], [0, 0, 1, 1], [], []>} : vector<16x32xbf16>, vector<32x256xbf16>, vector<16x256xf32> -> vector<16x256xf32>
    %307 = vector.broadcast %11 : vector<1x256xf32> to vector<16x256xf32>
    %308 = arith.addf %306, %307 : vector<16x256xf32>
    %cst_88 = arith.constant 0.000000e+00 : f32
    %309 = vector.broadcast %cst_88 : f32 to vector<16x256xf32>
    %310 = arith.maximumf %308, %309 : vector<16x256xf32>
    %311 = arith.truncf %305 : vector<16x4xf32> to vector<16x4xbf16>
    %cst_89 = arith.constant dense<0.000000e+00> : vector<16x256xf32>
    %312 = tpu.matmul %311, %3, %cst_89 {dimension_numbers = #tpu.dot_dimension_numbers<[1], [0], [0], [1], [0, 0, 1, 1], [], []>} : vector<16x4xbf16>, vector<4x256xbf16>, vector<16x256xf32> -> vector<16x256xf32>
    %313 = arith.mulf %310, %312 : vector<16x256xf32>
    %314 = arith.truncf %313 : vector<16x256xf32> to vector<16x256xbf16>
    %cst_90 = arith.constant dense<0.000000e+00> : vector<16x32xf32>
    %315 = tpu.matmul %314, %5, %cst_90 {dimension_numbers = #tpu.dot_dimension_numbers<[1], [0], [0], [1], [0, 0, 1, 1], [], []>} : vector<16x256xbf16>, vector<256x32xbf16>, vector<16x32xf32> -> vector<16x32xf32>
    %cst_91 = arith.constant dense<0.000000e+00> : vector<16x32xf32>
    %316 = tpu.matmul %305, %12, %cst_91 {dimension_numbers = #tpu.dot_dimension_numbers<[1], [0], [0], [1], [0, 0, 1, 1], [], []>} : vector<16x4xf32>, vector<4x32xf32>, vector<16x32xf32> -> vector<16x32xf32>
    %317 = arith.addf %315, %316 : vector<16x32xf32>
    %318 = arith.addf %291, %317 : vector<16x32xf32>
    %cst_92 = arith.constant dense<0.000000e+00> : vector<16xf32>
    %319 = vector.multi_reduction <add>, %318, %cst_92 [1] : vector<16x32xf32> to vector<16xf32>
    %320 = vector.shape_cast %319 : vector<16xf32> to vector<16x1xf32>
    %cst_93 = arith.constant 3.200000e+01 : f32
    %321 = vector.broadcast %cst_93 : f32 to vector<16x1xf32>
    %322 = arith.divf %320, %321 : vector<16x1xf32>
    %323 = vector.broadcast %322 : vector<16x1xf32> to vector<16x32xf32>
    %324 = arith.subf %318, %323 : vector<16x32xf32>
    %325 = arith.mulf %324, %324 : vector<16x32xf32>
    %cst_94 = arith.constant dense<0.000000e+00> : vector<16xf32>
    %326 = vector.multi_reduction <add>, %325, %cst_94 [1] : vector<16x32xf32> to vector<16xf32>
    %327 = vector.shape_cast %326 : vector<16xf32> to vector<16x1xf32>
    %cst_95 = arith.constant 3.200000e+01 : f32
    %328 = vector.broadcast %cst_95 : f32 to vector<16x1xf32>
    %329 = arith.divf %327, %328 : vector<16x1xf32>
    %330 = vector.broadcast %322 : vector<16x1xf32> to vector<16x32xf32>
    %331 = arith.subf %318, %330 : vector<16x32xf32>
    %cst_96 = arith.constant 9.99999974E-6 : f32
    %332 = vector.broadcast %cst_96 : f32 to vector<16x1xf32>
    %333 = arith.addf %329, %332 : vector<16x1xf32>
    %334 = math.rsqrt %333 : vector<16x1xf32>
    %335 = vector.broadcast %334 : vector<16x1xf32> to vector<16x32xf32>
    %336 = arith.mulf %331, %335 : vector<16x32xf32>
    %337 = vector.broadcast %13 : vector<1x32xf32> to vector<16x32xf32>
    %338 = arith.mulf %336, %337 : vector<16x32xf32>
    %339 = vector.broadcast %14 : vector<1x32xf32> to vector<16x32xf32>
    %340 = arith.addf %338, %339 : vector<16x32xf32>
    %341 = vector.shape_cast %340 : vector<16x32xf32> to vector<2x8x32xf32>
    %c0_97 = arith.constant 0 : index
    %c0_98 = arith.constant 0 : index
    %c0_99 = arith.constant 0 : index
    %342 = vector.load %arg4[%c0_97, %c0_98, %c0_99] : memref<2x8x32xf32, #tpu.memory_space<vmem>>, vector<2x8x32xf32>
    tpu.vector_store %arg4[%c0_97, %c0_98, %c0_99], %341 {strides = array<i32>} : memref<2x8x32xf32, #tpu.memory_space<vmem>>, vector<2x8x32xf32>,
    return
  }
}

</mosaic_0001>

<llo_original>
// kernel: tpu_custom_call.1
$region0: #{tpu_custom_call.1}
  #allocation0 [shape = 'u32[]', space=smem, size = 0x4, offset = 0x4, fixed_abs, tag = 'smem constant byte address 0x4 - core index']
  #allocation1 [shape = 'u32[72,128]{1,0:T(1,128)}', space=vmem, size = 0x9000, scoped, tag = 'internal scratch']
  %s0 = inlined_call_operand.hbm [shape: f32[2,8,32], index: 0, kind: input, shape index: {}]
  %s1 = inlined_call_operand.hbm [shape: f32[2,1,8], index: 1, kind: input, shape index: {}]
  %s2 = inlined_call_operand.hbm [shape: bf16[400,256], index: 2, kind: input, shape index: {}]
  %s3 = inlined_call_operand.hbm [shape: f32[16,256], index: 3, kind: input, shape index: {}]
  %s4 = inlined_call_operand.hbm [shape: f32[2,8,32], index: 4, kind: output, shape index: {}]
  %s5 = sld [smem:[#allocation0]]
  $region42: #{tpu_custom_call.1} parent=0
    _
  %s7 = ssub.s32 1, %s5
  %s8 = scalar_select 0, %s7, %s5
  $region1: #{tpu_custom_call.1} parent=0
    #allocation2 [shape = 'u8[8192]{0}', space=vmem, size = 0x2000, scoped, tag = 'input window, operand 0, single buffered']
    #allocation3 [shape = 's32[1]{0}', space=sflag, size = 0x4, scoped, tag = 'scoped memory for tpu_custom_call.1']
    #allocation4 [shape = 's32[1]{0}', space=sflag, size = 0x4, scoped, tag = 'scoped memory for tpu_custom_call.1']
    #allocation5 [shape = 'u8[1024]{0}', space=vmem, size = 0x400, scoped, tag = 'input window, operand 1, single buffered']
    #allocation6 [shape = 's32[1]{0}', space=sflag, size = 0x4, scoped, tag = 'scoped memory for tpu_custom_call.1']
    #allocation7 [shape = 'u8[204800]{0}', space=vmem, size = 0x32000, scoped, tag = 'input window, operand 2, single buffered']
    #allocation8 [shape = 'u8[16384]{0}', space=vmem, size = 0x4000, scoped, tag = 'input window, operand 3, single buffered']
    #allocation9 [shape = 's32[1]{0}', space=sflag, size = 0x4, scoped, tag = 'scoped memory for tpu_custom_call.1']
    #allocation10 [shape = 'u8[8192]{0}', space=vmem, size = 0x2000, scoped, tag = 'output window, operand 0, single buffered']
    %9 = vsyncpa [#allocation3], 0
    %10 = vsyncpa [#allocation6], 0
    %11 = vsyncpa [#allocation9], 0
    %12 = vsyncpa [#allocation4], 0
    // Predicated region
    $region2: #{tpu_custom_call.1} parent=1 // pred_check
      _
    $region3: #{tpu_custom_call.1} parent=1 // pred_check_branch
      %14 = sbr.rel (0) target = $region5
    $region4: #{tpu_custom_call.1} parent=1 // pred_region
      %16 = vsyncadd [#allocation3], 0
      %s17 = sshll.u32 %s0, 4
      %s18 = int_to_ptr.hbm [resolvable:$true] %s17
      %s19 = sshll.u32 [#allocation2], 4
      %s20 = int_to_ptr.vmem [resolvable:$true] %s19
      %25 = dma.hbm_to_vmem [thread:$0]  %s18, 256, %s20, [#allocation3], 128, 128, 8
    $region5: #{tpu_custom_call.1} parent=1 // pred_fallthru
      _
    // Predicated region
    $region6: #{tpu_custom_call.1} parent=1 // pred_check
      _
    $region7: #{tpu_custom_call.1} parent=1 // pred_check_branch
      %27 = sbr.rel (0) target = $region9
    $region8: #{tpu_custom_call.1} parent=1 // pred_region
      %29 = vsyncadd [#allocation6], 0
      %s30 = sshll.u32 %s1, 4
      %s31 = int_to_ptr.hbm [resolvable:$true] %s30
      %s32 = sshll.u32 [#allocation5], 4
      %s33 = int_to_ptr.vmem [resolvable:$true] %s32
      %38 = dma.hbm_to_vmem [thread:$0]  %s31, 32, %s33, [#allocation6], 16, 16, 1
    $region9: #{tpu_custom_call.1} parent=1 // pred_fallthru
      _
    // Predicated region
    $region10: #{tpu_custom_call.1} parent=1 // pred_check
      _
    $region11: #{tpu_custom_call.1} parent=1 // pred_check_branch
      %40 = sbr.rel (0) target = $region13
    $region12: #{tpu_custom_call.1} parent=1 // pred_region
      %42 = vsyncadd [#allocation6], 0
      %s43 = sshll.u32 %s2, 4
      %s44 = int_to_ptr.hbm [resolvable:$true] %s43
      %s45 = sshll.u32 [#allocation7], 4
      %s46 = int_to_ptr.vmem [resolvable:$true] %s45
      %51 = dma.hbm_to_vmem [thread:$0]  %s44, 6400, %s46, [#allocation6], 128, 128, 8
    $region13: #{tpu_custom_call.1} parent=1 // pred_fallthru
      _
    // Predicated region
    $region14: #{tpu_custom_call.1} parent=1 // pred_check
      _
    $region15: #{tpu_custom_call.1} parent=1 // pred_check_branch
      %53 = sbr.rel (0) target = $region17
    $region16: #{tpu_custom_call.1} parent=1 // pred_region
      %55 = vsyncadd [#allocation9], 0
      %s56 = sshll.u32 %s3, 4
      %s57 = int_to_ptr.hbm [resolvable:$true] %s56
      %s58 = sshll.u32 [#allocation8], 4
      %s59 = int_to_ptr.vmem [resolvable:$true] %s58
      %64 = dma.hbm_to_vmem [thread:$0]  %s57, 512, %s59, [#allocation9], 256, 256, 16
    $region17: #{tpu_custom_call.1} parent=1 // pred_fallthru
      _
    // Predicated region
    $region18: #{tpu_custom_call.1} parent=1 // pred_check
      _
    $region19: #{tpu_custom_call.1} parent=1 // pred_check_branch
      %66 = sbr.rel (0) target = $region21
    $region20: #{tpu_custom_call.1} parent=1 // pred_region
      %68 = dma.done [#allocation3], 256
    $region21: #{tpu_custom_call.1} parent=1 // pred_fallthru
      _
    // Predicated region
    $region22: #{tpu_custom_call.1} parent=1 // pred_check
      _
    $region23: #{tpu_custom_call.1} parent=1 // pred_check_branch
      %70 = sbr.rel (0) target = $region25
    $region24: #{tpu_custom_call.1} parent=1 // pred_region
      %72 = dma.done [#allocation6], 32
    $region25: #{tpu_custom_call.1} parent=1 // pred_fallthru
      _
    // Predicated region
    $region26: #{tpu_custom_call.1} parent=1 // pred_check
      _
    $region27: #{tpu_custom_call.1} parent=1 // pred_check_branch
      %74 = sbr.rel (0) target = $region29
    $region28: #{tpu_custom_call.1} parent=1 // pred_region
      %76 = dma.done [#allocation6], 6400
    $region29: #{tpu_custom_call.1} parent=1 // pred_fallthru
      _
    // Predicated region
    $region30: #{tpu_custom_call.1} parent=1 // pred_check
      _
    $region31: #{tpu_custom_call.1} parent=1 // pred_check_branch
      %78 = sbr.rel (0) target = $region33
    $region32: #{tpu_custom_call.1} parent=1 // pred_region
      %80 = dma.done [#allocation9], 512
    $region33: #{tpu_custom_call.1} parent=1 // pred_fallthru
      _
    %v82 = vld [vmem:[#allocation7] sm:$0xf]
    %v83 = vld [vmem:[#allocation7 + $0x8] sm:$0xf]
    %v84 = vld [vmem:[#allocation7 + $0x10] sm:$0xf]
    %v85 = vld [vmem:[#allocation7 + $0x18] sm:$0xf]
    %v86 = vld [vmem:[#allocation7 + $0x20] sm:$0xf]
    %v87 = vld [vmem:[#allocation7 + $0x28] sm:$0xf]
    %v88 = vld [vmem:[#allocation7 + $0x30] sm:$0xf]
    %v89 = vld [vmem:[#allocation7 + $0x38] sm:$0xf]
    %v90 = vld [vmem:[#allocation7 + $0x40] sm:$0xf]
    %v91 = vld [vmem:[#allocation7 + $0x48] sm:$0xf]
    %v92 = vld [vmem:[#allocation7 + $0x50] sm:$0xf]
    %v93 = vld [vmem:[#allocation7 + $0x58] sm:$0xf]
    %v94 = vld [vmem:[#allocation7 + $0x60] sm:$0x33]
    %v95 = vld [vmem:[#allocation7 + $0x70] sm:$0xff]
    %v96 = vld [vmem:[#allocation7 + $0x78] sm:$0xff]
    %v97 = vld [vmem:[#allocation7 + $0x80] sm:$0xff]
    %v98 = vld [vmem:[#allocation7 + $0x88] sm:$0xff]
    %v99 = vld [vmem:[#allocation7 + $0x90] sm:$0xf]
    %v100 = vld [vmem:[#allocation7 + $0x98] sm:$0xf]
    %v101 = vld [vmem:[#allocation7 + $0xa0] sm:$0xf]
    %v102 = vld [vmem:[#allocation7 + $0xa8] sm:$0xf]
    %v103 = vld [vmem:[#allocation7 + $0xb0] sm:$0xf]
    %v104 = vld [vmem:[#allocation7 + $0xb8] sm:$0xf]
    %v105 = vld [vmem:[#allocation7 + $0xc0] sm:$0xf]
    %v106 = vld [vmem:[#allocation7 + $0xc8] sm:$0xf]
    %v107 = vld [vmem:[#allocation7 + $0xd0] sm:$0xf]
    %v108 = vld [vmem:[#allocation7 + $0xd8] sm:$0xf]
    %v109 = vld [vmem:[#allocation7 + $0xe0] sm:$0xf]
    %v110 = vld [vmem:[#allocation7 + $0xe8] sm:$0xf]
    %v111 = vld [vmem:[#allocation7 + $0xf0] sm:$0xf]
    %v112 = vld [vmem:[#allocation7 + $0xf8] sm:$0xf]
    %v113 = vld [vmem:[#allocation7 + $0x100] sm:$0xf]
    %v114 = vld [vmem:[#allocation7 + $0x108] sm:$0xf]
    %v115 = vld [vmem:[#allocation7 + $0x110] sm:$0xf]
    %v116 = vld [vmem:[#allocation7 + $0x118] sm:$0xf]
    %v117 = vld [vmem:[#allocation7 + $0x120] sm:$0xf]
    %v118 = vld [vmem:[#allocation7 + $0x128] sm:$0xf]
    %v119 = vld [vmem:[#allocation7 + $0x130] sm:$0xf]
    %v120 = vld [vmem:[#allocation7 + $0x138] sm:$0xf]
    %v121 = vld [vmem:[#allocation7 + $0x140] sm:$0xf]
    %v122 = vld [vmem:[#allocation7 + $0x148] sm:$0xf]
    %v123 = vld [vmem:[#allocation7 + $0x150] sm:$0xf]
    %v124 = vld [vmem:[#allocation7 + $0x158] sm:$0xf]
    %v125 = vld [vmem:[#allocation7 + $0x160] sm:$0xf]
    %v126 = vld [vmem:[#allocation7 + $0x168] sm:$0xf]
    %v127 = vld [vmem:[#allocation7 + $0x170] sm:$0xf]
    %v128 = vld [vmem:[#allocation7 + $0x178] sm:$0xf]
    %v129 = vld [vmem:[#allocation7 + $0x180] sm:$0xf]
    %v130 = vld [vmem:[#allocation7 + $0x188] sm:$0xf]
    %v131 = vld [vmem:[#allocation8] ss:$0 sm:$0xff]
    %v132 = vld [vmem:[#allocation8 + $0x1] ss:$0 sm:$0xff]
    %v133 = vld [vmem:[#allocation8 + $0x2] ss:$0 sm:$0xff]
    %v134 = vld [vmem:[#allocation8 + $0x3] ss:$0 sm:$0xff]
    %v135 = vld [vmem:[#allocation8 + $0x4] ss:$0 sm:$0xff]
    %s136 = scalar_lea.vmem [#allocation8], 5
    %v137 = vld [vmem:[%s136] ss:$8 sm:$0x3]
    %v138 = vld [vmem:[#allocation8 + $0x10] sm:$0xf]
    %v139 = vld [vmem:[#allocation8 + $0x14] ss:$0 sm:$0xff]
    %v140 = vld [vmem:[#allocation8 + $0x15] ss:$0 sm:$0xff]
    %v141 = vld [vmem:[#allocation2] sm:$0xff]
    %v142 = vld [vmem:[#allocation2 + $0x8] sm:$0xff]
    %v143 = vld [vmem:[#allocation5] sm:$0x1]
    %v144 = vld [vmem:[#allocation5 + $0x1] sm:$0x1]
    %145 = vxpose.xlu0.b32.start [1/16] %v143, 128
    %146 = vxpose.xlu0.b32.cont [2/16] 0.0, 128
    %147 = vxpose.xlu0.b32.cont [3/16] 0.0, 128
    %148 = vxpose.xlu0.b32.cont [4/16] 0.0, 128
    %149 = vxpose.xlu0.b32.cont [5/16] 0.0, 128
    %150 = vxpose.xlu0.b32.cont [6/16] 0.0, 128
    %151 = vxpose.xlu0.b32.cont [7/16] 0.0, 128
    %152 = vxpose.xlu0.b32.cont [8/16] 0.0, 128
    %153 = vxpose.xlu0.b32.cont [9/16] 0.0, 128
    %154 = vxpose.xlu0.b32.cont [10/16] 0.0, 128
    %155 = vxpose.xlu0.b32.cont [11/16] 0.0, 128
    %156 = vxpose.xlu0.b32.cont [12/16] 0.0, 128
    %157 = vxpose.xlu0.b32.cont [13/16] 0.0, 128
    %158 = vxpose.xlu0.b32.cont [14/16] 0.0, 128
    %159 = vxpose.xlu0.b32.cont [15/16] 0.0, 128
    %160 = vxpose.xlu0.b32.end [16/16] 0.0, 128
    %v161 = vpop.trf.xlu0
    %v162 = vpop.trf.xlu0
    %v163 = vpop.trf.xlu0
    %v164 = vpop.trf.xlu0
    %v165 = vpop.trf.xlu0
    %v166 = vpop.trf.xlu0
    %v167 = vpop.trf.xlu0
    %v168 = vpop.trf.xlu0
    %v169 = vpop.trf.xlu0
    %v170 = vpop.trf.xlu0
    %v171 = vpop.trf.xlu0
    %v172 = vpop.trf.xlu0
    %v173 = vpop.trf.xlu0
    %v174 = vpop.trf.xlu0
    %v175 = vpop.trf.xlu0
    %v176 = vpop.trf.xlu0
    %177 = vxpose.xlu0.b32.start [1/16] %v144, 128
    %178 = vxpose.xlu0.b32.cont [2/16] 0.0, 128
    %179 = vxpose.xlu0.b32.cont [3/16] 0.0, 128
    %180 = vxpose.xlu0.b32.cont [4/16] 0.0, 128
    %181 = vxpose.xlu0.b32.cont [5/16] 0.0, 128
    %182 = vxpose.xlu0.b32.cont [6/16] 0.0, 128
    %183 = vxpose.xlu0.b32.cont [7/16] 0.0, 128
    %184 = vxpose.xlu0.b32.cont [8/16] 0.0, 128
    %185 = vxpose.xlu0.b32.cont [9/16] 0.0, 128
    %186 = vxpose.xlu0.b32.cont [10/16] 0.0, 128
    %187 = vxpose.xlu0.b32.cont [11/16] 0.0, 128
    %188 = vxpose.xlu0.b32.cont [12/16] 0.0, 128
    %189 = vxpose.xlu0.b32.cont [13/16] 0.0, 128
    %190 = vxpose.xlu0.b32.cont [14/16] 0.0, 128
    %191 = vxpose.xlu0.b32.cont [15/16] 0.0, 128
    %192 = vxpose.xlu0.b32.end [16/16] 0.0, 128
    %v193 = vpop.trf.xlu0
    %v194 = vpop.trf.xlu0
    %v195 = vpop.trf.xlu0
    %v196 = vpop.trf.xlu0
    %v197 = vpop.trf.xlu0
    %v198 = vpop.trf.xlu0
    %v199 = vpop.trf.xlu0
    %v200 = vpop.trf.xlu0
    %v201 = vpop.trf.xlu0
    %v202 = vpop.trf.xlu0
    %v203 = vpop.trf.xlu0
    %v204 = vpop.trf.xlu0
    %v205 = vpop.trf.xlu0
    %v206 = vpop.trf.xlu0
    %v207 = vpop.trf.xlu0
    %v208 = vpop.trf.xlu0
    %210 = vset.pattern.permute.xlu0 0
    %211 = vperm.xlu0 %210, %v161
    %v212 = vpop.permute.xlu0 %211
    %215 = vset.pattern.permute.xlu0 0
    %216 = vperm.xlu0 %215, %v193
    %v217 = vpop.permute.xlu0 %216
    %v221 = vperm.slane %v143, 0
    %v222 = vperm.slane %v144, 0
    %v225 = vsub.f32 %v212, %v221
    %v226 = vsub.f32 %v217, %v222
    %v227 = vand.u32 2147483647, %v225
    %v228 = vand.u32 2147483647, %v226
    %v229 = vpack.c.bf16 %v142, %v141
    %v234 = vunpack.c.l.b16 %v82
    %v235 = vunpack.c.l.b16 %v83
    %v236 = vunpack.c.l.b16 %v84
    %v237 = vunpack.c.l.b16 %v85
    %v238 = vpack.c.b16 %v235, %v234
    %v239 = vpack.c.b16 %v237, %v236
    %vm242 = vcmask 261120
    %v244 = vsel %vm242, %v229, 0
    %246 = vmatpush.bf16.msra.mxu0 0
    %247 = vmatpush.bf16.msra.mxu0 0
    %248 = vmatpush.bf16.msra.mxu0 0
    %249 = vmatpush.bf16.msra.mxu0 0
    %250 = vmatpush.bf16.msra.mxu0 0
    %251 = vmatpush.bf16.msra.mxu0 0
    %252 = vmatpush.bf16.msra.mxu0 %v239
    %253 = vmatpush.bf16.msra.mxu0 %v238
    %254 = vmatmul.bf16.gmra.mxu0 %v244
    %v255 = vpop.f32.mrf.mxu0
    %v256 = vadd.f32 %v131, %v255
    %v257 = vpop.f32.mrf.mxu0
    %v258 = vadd.f32 %v131, %v257
    %259 = vdwg.mxu0
    %v260 = vpack.c.bf16 %v256, %v256
    %v261 = vpack.c.bf16 %v258, %v258
    %v263 = vunpack.c.l.b16 %v260
    %v264 = vpack.c.b16 %v263, %v263
    %265 = vrot.lane.b32.xlu0 %v264, 96
    %v266 = vpop.permute.xlu0 %265
    %vm267 = vcmask 64512
    %v269 = vsel %vm267, %v260, 0
    %v272 = vsel %vm267, %v266, 0
    %274 = vmatpush.bf16.xpose.msra.mxu0 0
    %275 = vmatpush.bf16.xpose.msra.mxu0 0
    %276 = vmatpush.bf16.xpose.msra.mxu0 0
    %277 = vmatpush.bf16.xpose.msra.mxu0 0
    %278 = vmatpush.bf16.xpose.msra.mxu0 0
    %279 = vmatpush.bf16.xpose.msra.mxu0 0
    %280 = vmatpush.bf16.xpose.msra.mxu0 0
    %281 = vmatpush.bf16.xpose.msra.mxu0 %v272
    %282 = vmatmul.bf16.gmra.mxu0 %v269
    %v283 = vpop.f32.mrf.mxu0
    %v284 = vadd.f32 0.0, %v283
    %v285 = vpop.f32.mrf.mxu0
    %286 = vdwg.mxu0
    %v288 = vunpack.c.l.b16 %v261
    %v289 = vpack.c.b16 %v288, %v288
    %290 = vrot.lane.b32.xlu0 %v289, 96
    %v291 = vpop.permute.xlu0 %290
    %v293 = vsel %vm267, %v261, 0
    %v296 = vsel %vm267, %v291, 0
    %298 = vmatpush.bf16.xpose.msra.mxu0 0
    %299 = vmatpush.bf16.xpose.msra.mxu0 0
    %300 = vmatpush.bf16.xpose.msra.mxu0 0
    %301 = vmatpush.bf16.xpose.msra.mxu0 0
    %302 = vmatpush.bf16.xpose.msra.mxu0 0
    %303 = vmatpush.bf16.xpose.msra.mxu0 0
    %304 = vmatpush.bf16.xpose.msra.mxu0 0
    %305 = vmatpush.bf16.xpose.msra.mxu0 %v296
    %306 = vmatmul.bf16.gmra.mxu0 %v293
    %v307 = vpop.f32.mrf.mxu0
    %v308 = vadd.f32 0.0, %v307
    %v309 = vpop.f32.mrf.mxu0
    %310 = vdwg.mxu0
    %v311 = vmul.f32 %v227, 0.5
    %v312 = vmul.f32 %v228, 0.5
    %v313 = vsub.f32 %v284, %v311
    %v314 = vsub.f32 %v308, %v312
    %v315 = vsel %vm267, %v313, -inf
    %316 = vmax.xlane.f32.xlu0 %v315
    %v317 = vpop.xlane.xlu0 %316
    %v318 = vsel %vm267, %v314, -inf
    %319 = vmax.xlane.f32.xlu0 %v318
    %v320 = vpop.xlane.xlu0 %319
    %v321 = vsub.f32 %v313, %v317
    %v322 = vsub.f32 %v314, %v320
    %v323 = vmul.f32 %v321, 1.442695
    %v324 = vpow.pop %v323
    %v325 = vmul.f32 %v322, 1.442695
    %v326 = vpow.pop %v325
    %v327 = vsel %vm267, %v324, 0.0
    %328 = vadd.xlane.f32.xlu0 %v327
    %v329 = vpop.xlane.xlu0 %328
    %v330 = vsel %vm267, %v326, 0.0
    %331 = vadd.xlane.f32.xlu0 %v330
    %v332 = vpop.xlane.xlu0 %331
    %v333 = vrcp.pop %v329
    %v334 = vrcp.pop %v332
    %v335 = vmul.f32 %v324, %v333
    %v336 = vmul.f32 %v326, %v334
    %v337 = vpack.c.bf16 %v335, %v335
    %v338 = vpack.c.bf16 %v336, %v336
    %339 = vrot.lane.b32.xlu0 %v264, 64
    %v340 = vpop.permute.xlu0 %339
    %v342 = vsel %vm267, %v337, 0
    %vm344 = vcmask 1043456
    %v346 = vsel %vm344, %v340, 0
    %348 = vmatpush.bf16.msra.mxu0 0
    %349 = vmatpush.bf16.msra.mxu0 0
    %350 = vmatpush.bf16.msra.mxu0 0
    %351 = vmatpush.bf16.msra.mxu0 0
    %352 = vmatpush.bf16.msra.mxu0 0
    %353 = vmatpush.bf16.msra.mxu0 0
    %354 = vmatpush.bf16.msra.mxu0 0
    %355 = vmatpush.bf16.msra.mxu0 %v346
    %356 = vmatmul.bf16.gmra.mxu0 %v342
    %v357 = vpop.f32.mrf.mxu0
    %v358 = vadd.f32 0.0, %v357
    %v359 = vpop.f32.mrf.mxu0
    %360 = vdwg.mxu0
    %361 = vrot.lane.b32.xlu0 %v289, 64
    %v362 = vpop.permute.xlu0 %361
    %v364 = vsel %vm267, %v338, 0
    %v367 = vsel %vm344, %v362, 0
    %369 = vmatpush.bf16.msra.mxu0 0
    %370 = vmatpush.bf16.msra.mxu0 0
    %371 = vmatpush.bf16.msra.mxu0 0
    %372 = vmatpush.bf16.msra.mxu0 0
    %373 = vmatpush.bf16.msra.mxu0 0
    %374 = vmatpush.bf16.msra.mxu0 0
    %375 = vmatpush.bf16.msra.mxu0 0
    %376 = vmatpush.bf16.msra.mxu0 %v367
    %377 = vmatmul.bf16.gmra.mxu0 %v364
    %v378 = vpop.f32.mrf.mxu0
    %v379 = vadd.f32 0.0, %v378
    %v380 = vpop.f32.mrf.mxu0
    %381 = vdwg.mxu0
    %382 = vrot.lane.b32.xlu0 %v264, 120
    %v383 = vpop.permute.xlu0 %382
    %384 = vrot.lane.b32.xlu0 %v264, 88
    %v385 = vpop.permute.xlu0 %384
    %v387 = vsel %vm267, %v383, 0
    %v390 = vsel %vm267, %v385, 0
    %392 = vmatpush.bf16.xpose.msra.mxu0 0
    %393 = vmatpush.bf16.xpose.msra.mxu0 0
    %394 = vmatpush.bf16.xpose.msra.mxu0 0
    %395 = vmatpush.bf16.xpose.msra.mxu0 0
    %396 = vmatpush.bf16.xpose.msra.mxu0 0
    %397 = vmatpush.bf16.xpose.msra.mxu0 0
    %398 = vmatpush.bf16.xpose.msra.mxu0 0
    %399 = vmatpush.bf16.xpose.msra.mxu0 %v390
    %400 = vmatmul.bf16.gmra.mxu0 %v387
    %v401 = vpop.f32.mrf.mxu0
    %v402 = vadd.f32 0.0, %v401
    %v403 = vpop.f32.mrf.mxu0
    %404 = vdwg.mxu0
    %405 = vrot.lane.b32.xlu0 %v289, 120
    %v406 = vpop.permute.xlu0 %405
    %407 = vrot.lane.b32.xlu0 %v289, 88
    %v408 = vpop.permute.xlu0 %407
    %v410 = vsel %vm267, %v406, 0
    %v413 = vsel %vm267, %v408, 0
    %415 = vmatpush.bf16.xpose.msra.mxu0 0
    %416 = vmatpush.bf16.xpose.msra.mxu0 0
    %417 = vmatpush.bf16.xpose.msra.mxu0 0
    %418 = vmatpush.bf16.xpose.msra.mxu0 0
    %419 = vmatpush.bf16.xpose.msra.mxu0 0
    %420 = vmatpush.bf16.xpose.msra.mxu0 0
    %421 = vmatpush.bf16.xpose.msra.mxu0 0
    %422 = vmatpush.bf16.xpose.msra.mxu0 %v413
    %423 = vmatmul.bf16.gmra.mxu0 %v410
    %v424 = vpop.f32.mrf.mxu0
    %v425 = vadd.f32 0.0, %v424
    %v426 = vpop.f32.mrf.mxu0
    %427 = vdwg.mxu0
    %v428 = vmul.f32 %v227, 0.25
    %v429 = vmul.f32 %v228, 0.25
    %v430 = vsub.f32 %v402, %v428
    %v431 = vsub.f32 %v425, %v429
    %v432 = vsel %vm267, %v430, -inf
    %433 = vmax.xlane.f32.xlu0 %v432
    %v434 = vpop.xlane.xlu0 %433
    %v435 = vsel %vm267, %v431, -inf
    %436 = vmax.xlane.f32.xlu0 %v435
    %v437 = vpop.xlane.xlu0 %436
    %v438 = vsub.f32 %v430, %v434
    %v439 = vsub.f32 %v431, %v437
    %v440 = vmul.f32 %v438, 1.442695
    %v441 = vpow.pop %v440
    %v442 = vmul.f32 %v439, 1.442695
    %v443 = vpow.pop %v442
    %v444 = vsel %vm267, %v441, 0.0
    %445 = vadd.xlane.f32.xlu0 %v444
    %v446 = vpop.xlane.xlu0 %445
    %v447 = vsel %vm267, %v443, 0.0
    %448 = vadd.xlane.f32.xlu0 %v447
    %v449 = vpop.xlane.xlu0 %448
    %v450 = vrcp.pop %v446
    %v451 = vrcp.pop %v449
    %v452 = vmul.f32 %v441, %v450
    %v453 = vmul.f32 %v443, %v451
    %v454 = vpack.c.bf16 %v452, %v452
    %v455 = vpack.c.bf16 %v453, %v453
    %456 = vrot.lane.b32.xlu0 %v264, 56
    %v457 = vpop.permute.xlu0 %456
    %v459 = vsel %vm267, %v454, 0
    %v462 = vsel %vm344, %v457, 0
    %464 = vmatpush.bf16.msra.mxu0 0
    %465 = vmatpush.bf16.msra.mxu0 0
    %466 = vmatpush.bf16.msra.mxu0 0
    %467 = vmatpush.bf16.msra.mxu0 0
    %468 = vmatpush.bf16.msra.mxu0 0
    %469 = vmatpush.bf16.msra.mxu0 0
    %470 = vmatpush.bf16.msra.mxu0 0
    %471 = vmatpush.bf16.msra.mxu0 %v462
    %472 = vmatmul.bf16.gmra.mxu0 %v459
    %v473 = vpop.f32.mrf.mxu0
    %v474 = vadd.f32 0.0, %v473
    %v475 = vpop.f32.mrf.mxu0
    %476 = vdwg.mxu0
    %477 = vrot.lane.b32.xlu0 %v289, 56
    %v478 = vpop.permute.xlu0 %477
    %v480 = vsel %vm267, %v455, 0
    %v483 = vsel %vm344, %v478, 0
    %485 = vmatpush.bf16.msra.mxu0 0
    %486 = vmatpush.bf16.msra.mxu0 0
    %487 = vmatpush.bf16.msra.mxu0 0
    %488 = vmatpush.bf16.msra.mxu0 0
    %489 = vmatpush.bf16.msra.mxu0 0
    %490 = vmatpush.bf16.msra.mxu0 0
    %491 = vmatpush.bf16.msra.mxu0 0
    %492 = vmatpush.bf16.msra.mxu0 %v483
    %493 = vmatmul.bf16.gmra.mxu0 %v480
    %v494 = vpop.f32.mrf.mxu0
    %v495 = vadd.f32 0.0, %v494
    %v496 = vpop.f32.mrf.mxu0
    %497 = vdwg.mxu0
    %498 = vrot.lane.b32.xlu0 %v264, 112
    %v499 = vpop.permute.xlu0 %498
    %500 = vrot.lane.b32.xlu0 %v264, 80
    %v501 = vpop.permute.xlu0 %500
    %v503 = vsel %vm267, %v499, 0
    %v506 = vsel %vm267, %v501, 0
    %508 = vmatpush.bf16.xpose.msra.mxu0 0
    %509 = vmatpush.bf16.xpose.msra.mxu0 0
    %510 = vmatpush.bf16.xpose.msra.mxu0 0
    %511 = vmatpush.bf16.xpose.msra.mxu0 0
    %512 = vmatpush.bf16.xpose.msra.mxu0 0
    %513 = vmatpush.bf16.xpose.msra.mxu0 0
    %514 = vmatpush.bf16.xpose.msra.mxu0 0
    %515 = vmatpush.bf16.xpose.msra.mxu0 %v506
    %516 = vmatmul.bf16.gmra.mxu0 %v503
    %v517 = vpop.f32.mrf.mxu0
    %v518 = vadd.f32 0.0, %v517
    %v519 = vpop.f32.mrf.mxu0
    %520 = vdwg.mxu0
    %521 = vrot.lane.b32.xlu0 %v289, 112
    %v522 = vpop.permute.xlu0 %521
    %523 = vrot.lane.b32.xlu0 %v289, 80
    %v524 = vpop.permute.xlu0 %523
    %v526 = vsel %vm267, %v522, 0
    %v529 = vsel %vm267, %v524, 0
    %531 = vmatpush.bf16.xpose.msra.mxu0 0
    %532 = vmatpush.bf16.xpose.msra.mxu0 0
    %533 = vmatpush.bf16.xpose.msra.mxu0 0
    %534 = vmatpush.bf16.xpose.msra.mxu0 0
    %535 = vmatpush.bf16.xpose.msra.mxu0 0
    %536 = vmatpush.bf16.xpose.msra.mxu0 0
    %537 = vmatpush.bf16.xpose.msra.mxu0 0
    %538 = vmatpush.bf16.xpose.msra.mxu0 %v529
    %539 = vmatmul.bf16.gmra.mxu0 %v526
    %v540 = vpop.f32.mrf.mxu0
    %v541 = vadd.f32 0.0, %v540
    %v542 = vpop.f32.mrf.mxu0
    %543 = vdwg.mxu0
    %v544 = vmul.f32 %v227, 0.125
    %v545 = vmul.f32 %v228, 0.125
    %v546 = vsub.f32 %v518, %v544
    %v547 = vsub.f32 %v541, %v545
    %v548 = vsel %vm267, %v546, -inf
    %549 = vmax.xlane.f32.xlu0 %v548
    %v550 = vpop.xlane.xlu0 %549
    %v551 = vsel %vm267, %v547, -inf
    %552 = vmax.xlane.f32.xlu0 %v551
    %v553 = vpop.xlane.xlu0 %552
    %v554 = vsub.f32 %v546, %v550
    %v555 = vsub.f32 %v547, %v553
    %v556 = vmul.f32 %v554, 1.442695
    %v557 = vpow.pop %v556
    %v558 = vmul.f32 %v555, 1.442695
    %v559 = vpow.pop %v558
    %v560 = vsel %vm267, %v557, 0.0
    %561 = vadd.xlane.f32.xlu0 %v560
    %v562 = vpop.xlane.xlu0 %561
    %v563 = vsel %vm267, %v559, 0.0
    %564 = vadd.xlane.f32.xlu0 %v563
    %v565 = vpop.xlane.xlu0 %564
    %v566 = vrcp.pop %v562
    %v567 = vrcp.pop %v565
    %v568 = vmul.f32 %v557, %v566
    %v569 = vmul.f32 %v559, %v567
    %v570 = vpack.c.bf16 %v568, %v568
    %v571 = vpack.c.bf16 %v569, %v569
    %572 = vrot.lane.b32.xlu0 %v264, 48
    %v573 = vpop.permute.xlu0 %572
    %v575 = vsel %vm267, %v570, 0
    %v578 = vsel %vm344, %v573, 0
    %580 = vmatpush.bf16.msra.mxu0 0
    %581 = vmatpush.bf16.msra.mxu0 0
    %582 = vmatpush.bf16.msra.mxu0 0
    %583 = vmatpush.bf16.msra.mxu0 0
    %584 = vmatpush.bf16.msra.mxu0 0
    %585 = vmatpush.bf16.msra.mxu0 0
    %586 = vmatpush.bf16.msra.mxu0 0
    %587 = vmatpush.bf16.msra.mxu0 %v578
    %588 = vmatmul.bf16.gmra.mxu0 %v575
    %v589 = vpop.f32.mrf.mxu0
    %v590 = vadd.f32 0.0, %v589
    %v591 = vpop.f32.mrf.mxu0
    %592 = vdwg.mxu0
    %593 = vrot.lane.b32.xlu0 %v289, 48
    %v594 = vpop.permute.xlu0 %593
    %v596 = vsel %vm267, %v571, 0
    %v599 = vsel %vm344, %v594, 0
    %601 = vmatpush.bf16.msra.mxu0 0
    %602 = vmatpush.bf16.msra.mxu0 0
    %603 = vmatpush.bf16.msra.mxu0 0
    %604 = vmatpush.bf16.msra.mxu0 0
    %605 = vmatpush.bf16.msra.mxu0 0
    %606 = vmatpush.bf16.msra.mxu0 0
    %607 = vmatpush.bf16.msra.mxu0 0
    %608 = vmatpush.bf16.msra.mxu0 %v599
    %609 = vmatmul.bf16.gmra.mxu0 %v596
    %v610 = vpop.f32.mrf.mxu0
    %v611 = vadd.f32 0.0, %v610
    %v612 = vpop.f32.mrf.mxu0
    %613 = vdwg.mxu0
    %614 = vrot.lane.b32.xlu0 %v264, 104
    %v615 = vpop.permute.xlu0 %614
    %616 = vrot.lane.b32.xlu0 %v264, 72
    %v617 = vpop.permute.xlu0 %616
    %v619 = vsel %vm267, %v615, 0
    %v622 = vsel %vm267, %v617, 0
    %624 = vmatpush.bf16.xpose.msra.mxu0 0
    %625 = vmatpush.bf16.xpose.msra.mxu0 0
    %626 = vmatpush.bf16.xpose.msra.mxu0 0
    %627 = vmatpush.bf16.xpose.msra.mxu0 0
    %628 = vmatpush.bf16.xpose.msra.mxu0 0
    %629 = vmatpush.bf16.xpose.msra.mxu0 0
    %630 = vmatpush.bf16.xpose.msra.mxu0 0
    %631 = vmatpush.bf16.xpose.msra.mxu0 %v622
    %632 = vmatmul.bf16.gmra.mxu0 %v619
    %v633 = vpop.f32.mrf.mxu0
    %v634 = vadd.f32 0.0, %v633
    %v635 = vpop.f32.mrf.mxu0
    %636 = vdwg.mxu0
    %637 = vrot.lane.b32.xlu0 %v289, 104
    %v638 = vpop.permute.xlu0 %637
    %639 = vrot.lane.b32.xlu0 %v289, 72
    %v640 = vpop.permute.xlu0 %639
    %v642 = vsel %vm267, %v638, 0
    %v645 = vsel %vm267, %v640, 0
    %647 = vmatpush.bf16.xpose.msra.mxu0 0
    %648 = vmatpush.bf16.xpose.msra.mxu0 0
    %649 = vmatpush.bf16.xpose.msra.mxu0 0
    %650 = vmatpush.bf16.xpose.msra.mxu0 0
    %651 = vmatpush.bf16.xpose.msra.mxu0 0
    %652 = vmatpush.bf16.xpose.msra.mxu0 0
    %653 = vmatpush.bf16.xpose.msra.mxu0 0
    %654 = vmatpush.bf16.xpose.msra.mxu0 %v645
    %655 = vmatmul.bf16.gmra.mxu0 %v642
    %v656 = vpop.f32.mrf.mxu0
    %v657 = vadd.f32 0.0, %v656
    %v658 = vpop.f32.mrf.mxu0
    %659 = vdwg.mxu0
    %v660 = vmul.f32 %v227, 0.0625
    %v661 = vmul.f32 %v228, 0.0625
    %v662 = vsub.f32 %v634, %v660
    %v663 = vsub.f32 %v657, %v661
    %v664 = vsel %vm267, %v662, -inf
    %665 = vmax.xlane.f32.xlu0 %v664
    %v666 = vpop.xlane.xlu0 %665
    %v667 = vsel %vm267, %v663, -inf
    %668 = vmax.xlane.f32.xlu0 %v667
    %v669 = vpop.xlane.xlu0 %668
    %v670 = vsub.f32 %v662, %v666
    %v671 = vsub.f32 %v663, %v669
    %v672 = vmul.f32 %v670, 1.442695
    %v673 = vpow.pop %v672
    %v674 = vmul.f32 %v671, 1.442695
    %v675 = vpow.pop %v674
    %v676 = vsel %vm267, %v673, 0.0
    %677 = vadd.xlane.f32.xlu0 %v676
    %v678 = vpop.xlane.xlu0 %677
    %v679 = vsel %vm267, %v675, 0.0
    %680 = vadd.xlane.f32.xlu0 %v679
    %v681 = vpop.xlane.xlu0 %680
    %v682 = vrcp.pop %v678
    %v683 = vrcp.pop %v681
    %v684 = vmul.f32 %v673, %v682
    %v685 = vmul.f32 %v675, %v683
    %v686 = vpack.c.bf16 %v684, %v684
    %v687 = vpack.c.bf16 %v685, %v685
    %688 = vrot.lane.b32.xlu0 %v264, 40
    %v689 = vpop.permute.xlu0 %688
    %v691 = vsel %vm267, %v686, 0
    %v694 = vsel %vm344, %v689, 0
    %696 = vmatpush.bf16.msra.mxu0 0
    %697 = vmatpush.bf16.msra.mxu0 0
    %698 = vmatpush.bf16.msra.mxu0 0
    %699 = vmatpush.bf16.msra.mxu0 0
    %700 = vmatpush.bf16.msra.mxu0 0
    %701 = vmatpush.bf16.msra.mxu0 0
    %702 = vmatpush.bf16.msra.mxu0 0
    %703 = vmatpush.bf16.msra.mxu0 %v694
    %704 = vmatmul.bf16.gmra.mxu0 %v691
    %v705 = vpop.f32.mrf.mxu0
    %v706 = vadd.f32 0.0, %v705
    %v707 = vpop.f32.mrf.mxu0
    %708 = vdwg.mxu0
    %709 = vrot.lane.b32.xlu0 %v289, 40
    %v710 = vpop.permute.xlu0 %709
    %v712 = vsel %vm267, %v687, 0
    %v715 = vsel %vm344, %v710, 0
    %717 = vmatpush.bf16.msra.mxu0 0
    %718 = vmatpush.bf16.msra.mxu0 0
    %719 = vmatpush.bf16.msra.mxu0 0
    %720 = vmatpush.bf16.msra.mxu0 0
    %721 = vmatpush.bf16.msra.mxu0 0
    %722 = vmatpush.bf16.msra.mxu0 0
    %723 = vmatpush.bf16.msra.mxu0 0
    %724 = vmatpush.bf16.msra.mxu0 %v715
    %725 = vmatmul.bf16.gmra.mxu0 %v712
    %v726 = vpop.f32.mrf.mxu0
    %v727 = vadd.f32 0.0, %v726
    %v728 = vpop.f32.mrf.mxu0
    %729 = vdwg.mxu0
    %732 = vrot.lane.b32.xlu0 %v474, 8
    %v733 = vpop.permute.xlu0 %732
    %734 = vrot.lane.b32.xlu0 %v495, 8
    %v735 = vpop.permute.xlu0 %734
    %740 = vrot.lane.b32.xlu0 %v590, 16
    %v741 = vpop.permute.xlu0 %740
    %742 = vrot.lane.b32.xlu0 %v611, 16
    %v743 = vpop.permute.xlu0 %742
    %748 = vrot.lane.b32.xlu0 %v706, 24
    %v749 = vpop.permute.xlu0 %748
    %750 = vrot.lane.b32.xlu0 %v727, 24
    %v751 = vpop.permute.xlu0 %750
    %v754 = vsel %vm267, %v358, %v733
    %v755 = vsel %vm267, %v379, %v735
    %vm756 = vcmask 130048
    %v757 = vsel %vm756, %v754, %v741
    %v758 = vsel %vm756, %v755, %v743
    %vm759 = vcmask 195584
    %v760 = vsel %vm759, %v757, %v749
    %v761 = vsel %vm759, %v758, %v751
    %v762 = vpack.c.bf16 %v761, %v760
    %v767 = vunpack.c.l.b16 %v86
    %v768 = vunpack.c.l.b16 %v87
    %v769 = vunpack.c.l.b16 %v88
    %v770 = vunpack.c.l.b16 %v89
    %v771 = vpack.c.b16 %v768, %v767
    %v772 = vpack.c.b16 %v770, %v769
    %v776 = vsel %vm242, %v762, 0
    %778 = vmatpush.bf16.msra.mxu0 0
    %779 = vmatpush.bf16.msra.mxu0 0
    %780 = vmatpush.bf16.msra.mxu0 0
    %781 = vmatpush.bf16.msra.mxu0 0
    %782 = vmatpush.bf16.msra.mxu0 0
    %783 = vmatpush.bf16.msra.mxu0 0
    %784 = vmatpush.bf16.msra.mxu0 %v772
    %785 = vmatpush.bf16.msra.mxu0 %v771
    %786 = vmatmul.bf16.gmra.mxu0 %v776
    %v787 = vpop.f32.mrf.mxu0
    %v788 = vadd.f32 %v132, %v787
    %v789 = vpop.f32.mrf.mxu0
    %v790 = vadd.f32 %v132, %v789
    %791 = vdwg.mxu0
    %v792 = vadd.f32 %v141, %v788
    %v793 = vadd.f32 %v142, %v790
    %v794 = vsel %vm242, %v792, 0.0
    %795 = vadd.xlane.f32.xlu0 %v794
    %v796 = vpop.xlane.xlu0 %795
    %v797 = vsel %vm242, %v793, 0.0
    %798 = vadd.xlane.f32.xlu0 %v797
    %v799 = vpop.xlane.xlu0 %798
    %v800 = vrcp.pop 32.0
    %v801 = vmul.f32 32.0, %v800
    %v802 = vsub.f32 1.0, %v801
    %v803 = vmul.f32 %v800, %v802
    %v804 = vadd.f32 %v800, %v803
    %vm805 = vweird.f32 %v800
    %v806 = vsel %vm805, %v800, %v804
    %v807 = vmul.f32 %v796, %v806
    %v808 = vmul.f32 %v799, %v806
    %v809 = vsub.f32 %v792, %v807
    %v810 = vsub.f32 %v793, %v808
    %v811 = vmul.f32 %v809, %v809
    %v812 = vmul.f32 %v810, %v810
    %v813 = vsel %vm242, %v811, 0.0
    %814 = vadd.xlane.f32.xlu0 %v813
    %v815 = vpop.xlane.xlu0 %814
    %v816 = vsel %vm242, %v812, 0.0
    %817 = vadd.xlane.f32.xlu0 %v816
    %v818 = vpop.xlane.xlu0 %817
    %v819 = vmul.f32 %v815, %v806
    %v820 = vmul.f32 %v818, %v806
    %v821 = vadd.f32 %v819, 1e-05
    %v822 = vadd.f32 %v820, 1e-05
    %v823 = vrsqrt.pop %v821
    %v824 = vmul.f32 %v823, %v821
    %v825 = vmul.f32 %v824, %v823
    %v826 = vmul.f32 0.5, %v825
    %v827 = vsub.f32 1.5, %v826
    %v828 = vmul.f32 %v823, %v827
    %vm829 = vweird.f32 %v821
    %vm830 = vweird.f32 %v823
    %vm831 = vmor %vm829, %vm830
    %v832 = vsel %vm831, %v823, %v828
    %v833 = vrsqrt.pop %v822
    %v834 = vmul.f32 %v833, %v822
    %v835 = vmul.f32 %v834, %v833
    %v836 = vmul.f32 0.5, %v835
    %v837 = vsub.f32 1.5, %v836
    %v838 = vmul.f32 %v833, %v837
    %vm839 = vweird.f32 %v822
    %vm840 = vweird.f32 %v833
    %vm841 = vmor %vm839, %vm840
    %v842 = vsel %vm841, %v833, %v838
    %v843 = vmul.f32 %v809, %v832
    %v844 = vmul.f32 %v810, %v842
    %v845 = vmul.f32 %v843, %v133
    %v846 = vmul.f32 %v844, %v133
    %v847 = vadd.f32 %v845, %v134
    %v848 = vadd.f32 %v846, %v134
    %v849 = vpack.c.bf16 %v848, %v847
    %v854 = vunpack.c.l.b16 %v90
    %v855 = vunpack.c.l.b16 %v91
    %v856 = vunpack.c.l.b16 %v92
    %v857 = vunpack.c.l.b16 %v93
    %v858 = vpack.c.b16 %v855, %v854
    %v859 = vpack.c.b16 %v857, %v856
    %v863 = vsel %vm242, %v849, 0
    %865 = vmatpush.bf16.msra.mxu0 0
    %866 = vmatpush.bf16.msra.mxu0 0
    %867 = vmatpush.bf16.msra.mxu0 0
    %868 = vmatpush.bf16.msra.mxu0 0
    %869 = vmatpush.bf16.msra.mxu0 0
    %870 = vmatpush.bf16.msra.mxu0 0
    %871 = vmatpush.bf16.msra.mxu0 %v859
    %872 = vmatpush.bf16.msra.mxu0 %v858
    %873 = vmatmul.bf16.gmra.mxu0 %v863
    %v874 = vpop.f32.mrf.mxu0
    %v875 = vadd.f32 %v135, %v874
    %v876 = vpop.f32.mrf.mxu0
    %v877 = vadd.f32 %v135, %v876
    %878 = vdwg.mxu0
    %vm879 = vcmask 31744
    %v880 = vsel %vm879, %v875, -inf
    %881 = vmax.xlane.f32.xlu0 %v880
    %v882 = vpop.xlane.xlu0 %881
    %v883 = vsel %vm879, %v877, -inf
    %884 = vmax.xlane.f32.xlu0 %v883
    %v885 = vpop.xlane.xlu0 %884
    %v886 = vsub.f32 %v875, %v882
    %v887 = vsub.f32 %v877, %v885
    %v888 = vmul.f32 %v886, 1.442695
    %v889 = vpow.pop %v888
    %v890 = vmul.f32 %v887, 1.442695
    %v891 = vpow.pop %v890
    %v892 = vsel %vm879, %v889, 0.0
    %893 = vadd.xlane.f32.xlu0 %v892
    %v894 = vpop.xlane.xlu0 %893
    %v895 = vsel %vm879, %v891, 0.0
    %896 = vadd.xlane.f32.xlu0 %v895
    %v897 = vpop.xlane.xlu0 %896
    %v898 = vrcp.pop %v894
    %v899 = vrcp.pop %v897
    %v900 = vmul.f32 %v889, %v898
    %v901 = vmul.f32 %v891, %v899
    %v903 = vperm.slane %v137, 0
    %v904 = vperm.slane %v137, 1
    %v911 = vunpack.c.l.b16 %v95
    %v912 = vunpack.c.h.b16 %v95
    %v913 = vunpack.c.l.b16 %v96
    %v914 = vunpack.c.h.b16 %v96
    %v915 = vunpack.c.l.b16 %v97
    %v916 = vunpack.c.h.b16 %v97
    %v917 = vunpack.c.l.b16 %v98
    %v918 = vunpack.c.h.b16 %v98
    %v919 = vpack.c.b16 %v913, %v911
    %v920 = vpack.c.b16 %v914, %v912
    %v921 = vpack.c.b16 %v917, %v915
    %v922 = vpack.c.b16 %v918, %v916
    %927 = vmatpush.bf16.msra.mxu0 0
    %928 = vmatpush.bf16.msra.mxu0 0
    %929 = vmatpush.bf16.msra.mxu0 0
    %930 = vmatpush.bf16.msra.mxu0 0
    %931 = vmatpush.bf16.msra.mxu0 0
    %932 = vmatpush.bf16.msra.mxu0 0
    %933 = vmatpush.bf16.msra.mxu0 %v921
    %934 = vmatpush.bf16.msra.mxu0 %v919
    %935 = vmatmul.bf16.gmra.mxu0 %v863
    %v936 = vpop.f32.mrf.mxu0
    %v937 = vadd.f32 %v903, %v936
    %v938 = vpop.f32.mrf.mxu0
    %v939 = vadd.f32 %v903, %v938
    %940 = vdwg.mxu0
    %941 = vmatpush.bf16.msra.mxu0 0
    %942 = vmatpush.bf16.msra.mxu0 0
    %943 = vmatpush.bf16.msra.mxu0 0
    %944 = vmatpush.bf16.msra.mxu0 0
    %945 = vmatpush.bf16.msra.mxu0 0
    %946 = vmatpush.bf16.msra.mxu0 0
    %947 = vmatpush.bf16.msra.mxu0 %v922
    %948 = vmatpush.bf16.msra.mxu0 %v920
    %949 = vmatmul.bf16.gmra.mxu0 %v863
    %v950 = vpop.f32.mrf.mxu0
    %v951 = vadd.f32 %v904, %v950
    %v952 = vpop.f32.mrf.mxu0
    %v953 = vadd.f32 %v904, %v952
    %954 = vdwg.mxu0
    %v955 = vmax.f32 %v937, 0.0
    %v956 = vmax.f32 %v951, 0.0
    %v957 = vmax.f32 %v939, 0.0
    %v958 = vmax.f32 %v953, 0.0
    %v959 = vpack.c.bf16 %v901, %v900
    %v961 = vunpack.c.l.b16 %v94
    %v962 = vunpack.c.h.b16 %v94
    %v963 = vpack.c.b16 %v961, %v961
    %v964 = vpack.c.b16 %v962, %v962
    %v966 = vsel %vm879, %v959, 0
    %vm968 = vcmask 1041408
    %v970 = vsel %vm968, %v963, 0
    %v973 = vsel %vm968, %v964, 0
    %975 = vmatpush.bf16.msra.mxu0 0
    %976 = vmatpush.bf16.msra.mxu0 0
    %977 = vmatpush.bf16.msra.mxu0 0
    %978 = vmatpush.bf16.msra.mxu0 0
    %979 = vmatpush.bf16.msra.mxu0 0
    %980 = vmatpush.bf16.msra.mxu0 0
    %981 = vmatpush.bf16.msra.mxu0 0
    %982 = vmatpush.bf16.msra.mxu0 %v970
    %983 = vmatmul.bf16.gmra.mxu0 %v966
    %v984 = vpop.f32.mrf.mxu0
    %v985 = vadd.f32 0.0, %v984
    %v986 = vpop.f32.mrf.mxu0
    %v987 = vadd.f32 0.0, %v986
    %988 = vdwg.mxu0
    %989 = vmatpush.bf16.msra.mxu0 0
    %990 = vmatpush.bf16.msra.mxu0 0
    %991 = vmatpush.bf16.msra.mxu0 0
    %992 = vmatpush.bf16.msra.mxu0 0
    %993 = vmatpush.bf16.msra.mxu0 0
    %994 = vmatpush.bf16.msra.mxu0 0
    %995 = vmatpush.bf16.msra.mxu0 0
    %996 = vmatpush.bf16.msra.mxu0 %v973
    %997 = vmatmul.bf16.gmra.mxu0 %v966
    %v998 = vpop.f32.mrf.mxu0
    %v999 = vadd.f32 0.0, %v998
    %v1000 = vpop.f32.mrf.mxu0
    %v1001 = vadd.f32 0.0, %v1000
    %1002 = vdwg.mxu0
    %v1003 = vmul.f32 %v955, %v985
    %v1004 = vmul.f32 %v956, %v999
    %v1005 = vmul.f32 %v957, %v987
    %v1006 = vmul.f32 %v958, %v1001
    %v1007 = vpack.c.bf16 %v1005, %v1003
    %v1008 = vpack.c.bf16 %v1006, %v1004
    %v1010 = vsel %vm879, %v900, 0
    %v1013 = vsel %vm879, %v901, 0
    %v1016 = vsel %vm344, %v138, 0
    %1018 = vmatpush.msra.mxu0 0.0
    %1019 = vmatpush.msra.mxu0 0.0
    %1020 = vmatpush.msra.mxu0 0.0
    %1021 = vmatpush.msra.mxu0 0.0
    %1022 = vmatpush.msra.mxu0 0.0
    %1023 = vmatpush.msra.mxu0 0.0
    %1024 = vmatpush.msra.mxu0 0.0
    %1025 = vmatpush.msra.mxu0 0.0
    %1026 = vmatpush.msra.mxu0 0.0
    %1027 = vmatpush.msra.mxu0 0.0
    %1028 = vmatpush.msra.mxu0 0.0
    %1029 = vmatpush.msra.mxu0 0.0
    %1030 = vmatpush.msra.mxu0 0.0
    %1031 = vmatpush.msra.mxu0 0.0
    %1032 = vmatpush.msra.mxu0 0.0
    %1033 = vmatpush.msra.mxu0 %v1016
    %1034 = vmatmul.f32.gmra.mxu0 %v1010
    %v1035 = vpop.f32.mrf.mxu0
    %v1036 = vadd.f32 0.0, %v1035
    %1037 = vmatmul.f32.gmra.mxu0 %v1013
    %v1038 = vpop.f32.mrf.mxu0
    %v1039 = vadd.f32 0.0, %v1038
    %1040 = vdwg.mxu0
    %v1073 = vunpack.c.l.b16 %v99
    %v1074 = vunpack.c.l.b16 %v100
    %v1075 = vunpack.c.l.b16 %v101
    %v1076 = vunpack.c.l.b16 %v102
    %v1077 = vunpack.c.l.b16 %v103
    %v1078 = vunpack.c.l.b16 %v104
    %v1079 = vunpack.c.l.b16 %v105
    %v1080 = vunpack.c.l.b16 %v106
    %v1081 = vunpack.c.l.b16 %v107
    %v1082 = vunpack.c.l.b16 %v108
    %v1083 = vunpack.c.l.b16 %v109
    %v1084 = vunpack.c.l.b16 %v110
    %v1085 = vunpack.c.l.b16 %v111
    %v1086 = vunpack.c.l.b16 %v112
    %v1087 = vunpack.c.l.b16 %v113
    %v1088 = vunpack.c.l.b16 %v114
    %v1089 = vunpack.c.l.b16 %v115
    %v1090 = vunpack.c.l.b16 %v116
    %v1091 = vunpack.c.l.b16 %v117
    %v1092 = vunpack.c.l.b16 %v118
    %v1093 = vunpack.c.l.b16 %v119
    %v1094 = vunpack.c.l.b16 %v120
    %v1095 = vunpack.c.l.b16 %v121
    %v1096 = vunpack.c.l.b16 %v122
    %v1097 = vunpack.c.l.b16 %v123
    %v1098 = vunpack.c.l.b16 %v124
    %v1099 = vunpack.c.l.b16 %v125
    %v1100 = vunpack.c.l.b16 %v126
    %v1101 = vunpack.c.l.b16 %v127
    %v1102 = vunpack.c.l.b16 %v128
    %v1103 = vunpack.c.l.b16 %v129
    %v1104 = vunpack.c.l.b16 %v130
    %v1105 = vpack.c.b16 %v1074, %v1073
    %v1106 = vpack.c.b16 %v1076, %v1075
    %v1107 = vpack.c.b16 %v1078, %v1077
    %v1108 = vpack.c.b16 %v1080, %v1079
    %v1109 = vpack.c.b16 %v1082, %v1081
    %v1110 = vpack.c.b16 %v1084, %v1083
    %v1111 = vpack.c.b16 %v1086, %v1085
    %v1112 = vpack.c.b16 %v1088, %v1087
    %v1113 = vpack.c.b16 %v1090, %v1089
    %v1114 = vpack.c.b16 %v1092, %v1091
    %v1115 = vpack.c.b16 %v1094, %v1093
    %v1116 = vpack.c.b16 %v1096, %v1095
    %v1117 = vpack.c.b16 %v1098, %v1097
    %v1118 = vpack.c.b16 %v1100, %v1099
    %v1119 = vpack.c.b16 %v1102, %v1101
    %v1120 = vpack.c.b16 %v1104, %v1103
    %1137 = vmatpush.bf16.msra.mxu0 %v1112
    %1138 = vmatpush.bf16.msra.mxu0 %v1111
    %1139 = vmatpush.bf16.msra.mxu0 %v1110
    %1140 = vmatpush.bf16.msra.mxu0 %v1109
    %1141 = vmatpush.bf16.msra.mxu0 %v1108
    %1142 = vmatpush.bf16.msra.mxu0 %v1107
    %1143 = vmatpush.bf16.msra.mxu0 %v1106
    %1144 = vmatpush.bf16.msra.mxu0 %v1105
    %1145 = vmatmul.bf16.gmra.mxu0 %v1007
    %v1146 = vpop.f32.mrf.mxu0
    %v1147 = vadd.f32 %v1036, %v1146
    %v1148 = vpop.f32.mrf.mxu0
    %v1149 = vadd.f32 %v1039, %v1148
    %1150 = vdwg.mxu0
    %1151 = vmatpush.bf16.msra.mxu0 %v1120
    %1152 = vmatpush.bf16.msra.mxu0 %v1119
    %1153 = vmatpush.bf16.msra.mxu0 %v1118
    %1154 = vmatpush.bf16.msra.mxu0 %v1117
    %1155 = vmatpush.bf16.msra.mxu0 %v1116
    %1156 = vmatpush.bf16.msra.mxu0 %v1115
    %1157 = vmatpush.bf16.msra.mxu0 %v1114
    %1158 = vmatpush.bf16.msra.mxu0 %v1113
    %1159 = vmatmul.bf16.gmra.mxu0 %v1008
    %v1160 = vpop.f32.mrf.mxu0
    %v1161 = vadd.f32 %v1147, %v1160
    %v1162 = vpop.f32.mrf.mxu0
    %v1163 = vadd.f32 %v1149, %v1162
    %1164 = vdwg.mxu0
    %v1165 = vadd.f32 %v847, %v1161
    %v1166 = vadd.f32 %v848, %v1163
    %v1167 = vsel %vm242, %v1165, 0.0
    %1168 = vadd.xlane.f32.xlu0 %v1167
    %v1169 = vpop.xlane.xlu0 %1168
    %v1170 = vsel %vm242, %v1166, 0.0
    %1171 = vadd.xlane.f32.xlu0 %v1170
    %v1172 = vpop.xlane.xlu0 %1171
    %v1173 = vmul.f32 %v1169, %v806
    %v1174 = vmul.f32 %v1172, %v806
    %v1175 = vsub.f32 %v1165, %v1173
    %v1176 = vsub.f32 %v1166, %v1174
    %v1177 = vmul.f32 %v1175, %v1175
    %v1178 = vmul.f32 %v1176, %v1176
    %v1179 = vsel %vm242, %v1177, 0.0
    %1180 = vadd.xlane.f32.xlu0 %v1179
    %v1181 = vpop.xlane.xlu0 %1180
    %v1182 = vsel %vm242, %v1178, 0.0
    %1183 = vadd.xlane.f32.xlu0 %v1182
    %v1184 = vpop.xlane.xlu0 %1183
    %v1185 = vmul.f32 %v1181, %v806
    %v1186 = vmul.f32 %v1184, %v806
    %v1187 = vadd.f32 %v1185, 1e-05
    %v1188 = vadd.f32 %v1186, 1e-05
    %v1189 = vrsqrt.pop %v1187
    %v1190 = vmul.f32 %v1189, %v1187
    %v1191 = vmul.f32 %v1190, %v1189
    %v1192 = vmul.f32 0.5, %v1191
    %v1193 = vsub.f32 1.5, %v1192
    %v1194 = vmul.f32 %v1189, %v1193
    %vm1195 = vweird.f32 %v1187
    %vm1196 = vweird.f32 %v1189
    %vm1197 = vmor %vm1195, %vm1196
    %v1198 = vsel %vm1197, %v1189, %v1194
    %v1199 = vrsqrt.pop %v1188
    %v1200 = vmul.f32 %v1199, %v1188
    %v1201 = vmul.f32 %v1200, %v1199
    %v1202 = vmul.f32 0.5, %v1201
    %v1203 = vsub.f32 1.5, %v1202
    %v1204 = vmul.f32 %v1199, %v1203
    %vm1205 = vweird.f32 %v1188
    %vm1206 = vweird.f32 %v1199
    %vm1207 = vmor %vm1205, %vm1206
    %v1208 = vsel %vm1207, %v1199, %v1204
    %v1209 = vmul.f32 %v1175, %v1198
    %v1210 = vmul.f32 %v1176, %v1208
    %v1211 = vmul.f32 %v1209, %v139
    %v1212 = vmul.f32 %v1210, %v139
    %v1213 = vadd.f32 %v1211, %v140
    %v1214 = vadd.f32 %v1212, %v140
    %v1215 = vpack.c.bf16 %v1214, %v1213
    %v1217 = vsel %vm242, %v1215, 0
    %1219 = vmatpush.bf16.msra.mxu0 0
    %1220 = vmatpush.bf16.msra.mxu0 0
    %1221 = vmatpush.bf16.msra.mxu0 0
    %1222 = vmatpush.bf16.msra.mxu0 0
    %1223 = vmatpush.bf16.msra.mxu0 0
    %1224 = vmatpush.bf16.msra.mxu0 0
    %1225 = vmatpush.bf16.msra.mxu0 %v239
    %1226 = vmatpush.bf16.msra.mxu0 %v238
    %1227 = vmatmul.bf16.gmra.mxu0 %v1217
    %v1228 = vpop.f32.mrf.mxu0
    %v1229 = vadd.f32 %v131, %v1228
    %v1230 = vpop.f32.mrf.mxu0
    %v1231 = vadd.f32 %v131, %v1230
    %1232 = vdwg.mxu0
    %v1233 = vpack.c.bf16 %v1229, %v1229
    %v1234 = vpack.c.bf16 %v1231, %v1231
    %v1236 = vunpack.c.l.b16 %v1233
    %v1237 = vpack.c.b16 %v1236, %v1236
    %1238 = vrot.lane.b32.xlu0 %v1237, 96
    %v1239 = vpop.permute.xlu0 %1238
    %v1241 = vsel %vm267, %v1233, 0
    %v1244 = vsel %vm267, %v1239, 0
    %1246 = vmatpush.bf16.xpose.msra.mxu0 0
    %1247 = vmatpush.bf16.xpose.msra.mxu0 0
    %1248 = vmatpush.bf16.xpose.msra.mxu0 0
    %1249 = vmatpush.bf16.xpose.msra.mxu0 0
    %1250 = vmatpush.bf16.xpose.msra.mxu0 0
    %1251 = vmatpush.bf16.xpose.msra.mxu0 0
    %1252 = vmatpush.bf16.xpose.msra.mxu0 0
    %1253 = vmatpush.bf16.xpose.msra.mxu0 %v1244
    %1254 = vmatmul.bf16.gmra.mxu0 %v1241
    %v1255 = vpop.f32.mrf.mxu0
    %v1256 = vadd.f32 0.0, %v1255
    %v1257 = vpop.f32.mrf.mxu0
    %1258 = vdwg.mxu0
    %v1260 = vunpack.c.l.b16 %v1234
    %v1261 = vpack.c.b16 %v1260, %v1260
    %1262 = vrot.lane.b32.xlu0 %v1261, 96
    %v1263 = vpop.permute.xlu0 %1262
    %v1265 = vsel %vm267, %v1234, 0
    %v1268 = vsel %vm267, %v1263, 0
    %1270 = vmatpush.bf16.xpose.msra.mxu0 0
    %1271 = vmatpush.bf16.xpose.msra.mxu0 0
    %1272 = vmatpush.bf16.xpose.msra.mxu0 0
    %1273 = vmatpush.bf16.xpose.msra.mxu0 0
    %1274 = vmatpush.bf16.xpose.msra.mxu0 0
    %1275 = vmatpush.bf16.xpose.msra.mxu0 0
    %1276 = vmatpush.bf16.xpose.msra.mxu0 0
    %1277 = vmatpush.bf16.xpose.msra.mxu0 %v1268
    %1278 = vmatmul.bf16.gmra.mxu0 %v1265
    %v1279 = vpop.f32.mrf.mxu0
    %v1280 = vadd.f32 0.0, %v1279
    %v1281 = vpop.f32.mrf.mxu0
    %1282 = vdwg.mxu0
    %v1283 = vsel %vm267, %v1256, -inf
    %1284 = vmax.xlane.f32.xlu0 %v1283
    %v1285 = vpop.xlane.xlu0 %1284
    %v1286 = vsel %vm267, %v1280, -inf
    %1287 = vmax.xlane.f32.xlu0 %v1286
    %v1288 = vpop.xlane.xlu0 %1287
    %v1289 = vsub.f32 %v1256, %v1285
    %v1290 = vsub.f32 %v1280, %v1288
    %v1291 = vmul.f32 %v1289, 1.442695
    %v1292 = vpow.pop %v1291
    %v1293 = vmul.f32 %v1290, 1.442695
    %v1294 = vpow.pop %v1293
    %v1295 = vsel %vm267, %v1292, 0.0
    %1296 = vadd.xlane.f32.xlu0 %v1295
    %v1297 = vpop.xlane.xlu0 %1296
    %v1298 = vsel %vm267, %v1294, 0.0
    %1299 = vadd.xlane.f32.xlu0 %v1298
    %v1300 = vpop.xlane.xlu0 %1299
    %v1301 = vrcp.pop %v1297
    %v1302 = vrcp.pop %v1300
    %v1303 = vmul.f32 %v1292, %v1301
    %v1304 = vmul.f32 %v1294, %v1302
    %v1305 = vpack.c.bf16 %v1303, %v1303
    %v1306 = vpack.c.bf16 %v1304, %v1304
    %1307 = vrot.lane.b32.xlu0 %v1237, 64
    %v1308 = vpop.permute.xlu0 %1307
    %v1310 = vsel %vm267, %v1305, 0
    %v1313 = vsel %vm344, %v1308, 0
    %1315 = vmatpush.bf16.msra.mxu0 0
    %1316 = vmatpush.bf16.msra.mxu0 0
    %1317 = vmatpush.bf16.msra.mxu0 0
    %1318 = vmatpush.bf16.msra.mxu0 0
    %1319 = vmatpush.bf16.msra.mxu0 0
    %1320 = vmatpush.bf16.msra.mxu0 0
    %1321 = vmatpush.bf16.msra.mxu0 0
    %1322 = vmatpush.bf16.msra.mxu0 %v1313
    %1323 = vmatmul.bf16.gmra.mxu0 %v1310
    %v1324 = vpop.f32.mrf.mxu0
    %v1325 = vadd.f32 0.0, %v1324
    %v1326 = vpop.f32.mrf.mxu0
    %1327 = vdwg.mxu0
    %1328 = vrot.lane.b32.xlu0 %v1261, 64
    %v1329 = vpop.permute.xlu0 %1328
    %v1331 = vsel %vm267, %v1306, 0
    %v1334 = vsel %vm344, %v1329, 0
    %1336 = vmatpush.bf16.msra.mxu0 0
    %1337 = vmatpush.bf16.msra.mxu0 0
    %1338 = vmatpush.bf16.msra.mxu0 0
    %1339 = vmatpush.bf16.msra.mxu0 0
    %1340 = vmatpush.bf16.msra.mxu0 0
    %1341 = vmatpush.bf16.msra.mxu0 0
    %1342 = vmatpush.bf16.msra.mxu0 0
    %1343 = vmatpush.bf16.msra.mxu0 %v1334
    %1344 = vmatmul.bf16.gmra.mxu0 %v1331
    %v1345 = vpop.f32.mrf.mxu0
    %v1346 = vadd.f32 0.0, %v1345
    %v1347 = vpop.f32.mrf.mxu0
    %1348 = vdwg.mxu0
    %1349 = vrot.lane.b32.xlu0 %v1237, 120
    %v1350 = vpop.permute.xlu0 %1349
    %1351 = vrot.lane.b32.xlu0 %v1237, 88
    %v1352 = vpop.permute.xlu0 %1351
    %v1354 = vsel %vm267, %v1350, 0
    %v1357 = vsel %vm267, %v1352, 0
    %1359 = vmatpush.bf16.xpose.msra.mxu0 0
    %1360 = vmatpush.bf16.xpose.msra.mxu0 0
    %1361 = vmatpush.bf16.xpose.msra.mxu0 0
    %1362 = vmatpush.bf16.xpose.msra.mxu0 0
    %1363 = vmatpush.bf16.xpose.msra.mxu0 0
    %1364 = vmatpush.bf16.xpose.msra.mxu0 0
    %1365 = vmatpush.bf16.xpose.msra.mxu0 0
    %1366 = vmatpush.bf16.xpose.msra.mxu0 %v1357
    %1367 = vmatmul.bf16.gmra.mxu0 %v1354
    %v1368 = vpop.f32.mrf.mxu0
    %v1369 = vadd.f32 0.0, %v1368
    %v1370 = vpop.f32.mrf.mxu0
    %1371 = vdwg.mxu0
    %1372 = vrot.lane.b32.xlu0 %v1261, 120
    %v1373 = vpop.permute.xlu0 %1372
    %1374 = vrot.lane.b32.xlu0 %v1261, 88
    %v1375 = vpop.permute.xlu0 %1374
    %v1377 = vsel %vm267, %v1373, 0
    %v1380 = vsel %vm267, %v1375, 0
    %1382 = vmatpush.bf16.xpose.msra.mxu0 0
    %1383 = vmatpush.bf16.xpose.msra.mxu0 0
    %1384 = vmatpush.bf16.xpose.msra.mxu0 0
    %1385 = vmatpush.bf16.xpose.msra.mxu0 0
    %1386 = vmatpush.bf16.xpose.msra.mxu0 0
    %1387 = vmatpush.bf16.xpose.msra.mxu0 0
    %1388 = vmatpush.bf16.xpose.msra.mxu0 0
    %1389 = vmatpush.bf16.xpose.msra.mxu0 %v1380
    %1390 = vmatmul.bf16.gmra.mxu0 %v1377
    %v1391 = vpop.f32.mrf.mxu0
    %v1392 = vadd.f32 0.0, %v1391
    %v1393 = vpop.f32.mrf.mxu0
    %1394 = vdwg.mxu0
    %v1395 = vsel %vm267, %v1369, -inf
    %1396 = vmax.xlane.f32.xlu0 %v1395
    %v1397 = vpop.xlane.xlu0 %1396
    %v1398 = vsel %vm267, %v1392, -inf
    %1399 = vmax.xlane.f32.xlu0 %v1398
    %v1400 = vpop.xlane.xlu0 %1399
    %v1401 = vsub.f32 %v1369, %v1397
    %v1402 = vsub.f32 %v1392, %v1400
    %v1403 = vmul.f32 %v1401, 1.442695
    %v1404 = vpow.pop %v1403
    %v1405 = vmul.f32 %v1402, 1.442695
    %v1406 = vpow.pop %v1405
    %v1407 = vsel %vm267, %v1404, 0.0
    %1408 = vadd.xlane.f32.xlu0 %v1407
    %v1409 = vpop.xlane.xlu0 %1408
    %v1410 = vsel %vm267, %v1406, 0.0
    %1411 = vadd.xlane.f32.xlu0 %v1410
    %v1412 = vpop.xlane.xlu0 %1411
    %v1413 = vrcp.pop %v1409
    %v1414 = vrcp.pop %v1412
    %v1415 = vmul.f32 %v1404, %v1413
    %v1416 = vmul.f32 %v1406, %v1414
    %v1417 = vpack.c.bf16 %v1415, %v1415
    %v1418 = vpack.c.bf16 %v1416, %v1416
    %1419 = vrot.lane.b32.xlu0 %v1237, 56
    %v1420 = vpop.permute.xlu0 %1419
    %v1422 = vsel %vm267, %v1417, 0
    %v1425 = vsel %vm344, %v1420, 0
    %1427 = vmatpush.bf16.msra.mxu0 0
    %1428 = vmatpush.bf16.msra.mxu0 0
    %1429 = vmatpush.bf16.msra.mxu0 0
    %1430 = vmatpush.bf16.msra.mxu0 0
    %1431 = vmatpush.bf16.msra.mxu0 0
    %1432 = vmatpush.bf16.msra.mxu0 0
    %1433 = vmatpush.bf16.msra.mxu0 0
    %1434 = vmatpush.bf16.msra.mxu0 %v1425
    %1435 = vmatmul.bf16.gmra.mxu0 %v1422
    %v1436 = vpop.f32.mrf.mxu0
    %v1437 = vadd.f32 0.0, %v1436
    %v1438 = vpop.f32.mrf.mxu0
    %1439 = vdwg.mxu0
    %1440 = vrot.lane.b32.xlu0 %v1261, 56
    %v1441 = vpop.permute.xlu0 %1440
    %v1443 = vsel %vm267, %v1418, 0
    %v1446 = vsel %vm344, %v1441, 0
    %1448 = vmatpush.bf16.msra.mxu0 0
    %1449 = vmatpush.bf16.msra.mxu0 0
    %1450 = vmatpush.bf16.msra.mxu0 0
    %1451 = vmatpush.bf16.msra.mxu0 0
    %1452 = vmatpush.bf16.msra.mxu0 0
    %1453 = vmatpush.bf16.msra.mxu0 0
    %1454 = vmatpush.bf16.msra.mxu0 0
    %1455 = vmatpush.bf16.msra.mxu0 %v1446
    %1456 = vmatmul.bf16.gmra.mxu0 %v1443
    %v1457 = vpop.f32.mrf.mxu0
    %v1458 = vadd.f32 0.0, %v1457
    %v1459 = vpop.f32.mrf.mxu0
    %1460 = vdwg.mxu0
    %1461 = vrot.lane.b32.xlu0 %v1237, 112
    %v1462 = vpop.permute.xlu0 %1461
    %1463 = vrot.lane.b32.xlu0 %v1237, 80
    %v1464 = vpop.permute.xlu0 %1463
    %v1466 = vsel %vm267, %v1462, 0
    %v1469 = vsel %vm267, %v1464, 0
    %1471 = vmatpush.bf16.xpose.msra.mxu0 0
    %1472 = vmatpush.bf16.xpose.msra.mxu0 0
    %1473 = vmatpush.bf16.xpose.msra.mxu0 0
    %1474 = vmatpush.bf16.xpose.msra.mxu0 0
    %1475 = vmatpush.bf16.xpose.msra.mxu0 0
    %1476 = vmatpush.bf16.xpose.msra.mxu0 0
    %1477 = vmatpush.bf16.xpose.msra.mxu0 0
    %1478 = vmatpush.bf16.xpose.msra.mxu0 %v1469
    %1479 = vmatmul.bf16.gmra.mxu0 %v1466
    %v1480 = vpop.f32.mrf.mxu0
    %v1481 = vadd.f32 0.0, %v1480
    %v1482 = vpop.f32.mrf.mxu0
    %1483 = vdwg.mxu0
    %1484 = vrot.lane.b32.xlu0 %v1261, 112
    %v1485 = vpop.permute.xlu0 %1484
    %1486 = vrot.lane.b32.xlu0 %v1261, 80
    %v1487 = vpop.permute.xlu0 %1486
    %v1489 = vsel %vm267, %v1485, 0
    %v1492 = vsel %vm267, %v1487, 0
    %1494 = vmatpush.bf16.xpose.msra.mxu0 0
    %1495 = vmatpush.bf16.xpose.msra.mxu0 0
    %1496 = vmatpush.bf16.xpose.msra.mxu0 0
    %1497 = vmatpush.bf16.xpose.msra.mxu0 0
    %1498 = vmatpush.bf16.xpose.msra.mxu0 0
    %1499 = vmatpush.bf16.xpose.msra.mxu0 0
    %1500 = vmatpush.bf16.xpose.msra.mxu0 0
    %1501 = vmatpush.bf16.xpose.msra.mxu0 %v1492
    %1502 = vmatmul.bf16.gmra.mxu0 %v1489
    %v1503 = vpop.f32.mrf.mxu0
    %v1504 = vadd.f32 0.0, %v1503
    %v1505 = vpop.f32.mrf.mxu0
    %1506 = vdwg.mxu0
    %v1507 = vsel %vm267, %v1481, -inf
    %1508 = vmax.xlane.f32.xlu0 %v1507
    %v1509 = vpop.xlane.xlu0 %1508
    %v1510 = vsel %vm267, %v1504, -inf
    %1511 = vmax.xlane.f32.xlu0 %v1510
    %v1512 = vpop.xlane.xlu0 %1511
    %v1513 = vsub.f32 %v1481, %v1509
    %v1514 = vsub.f32 %v1504, %v1512
    %v1515 = vmul.f32 %v1513, 1.442695
    %v1516 = vpow.pop %v1515
    %v1517 = vmul.f32 %v1514, 1.442695
    %v1518 = vpow.pop %v1517
    %v1519 = vsel %vm267, %v1516, 0.0
    %1520 = vadd.xlane.f32.xlu0 %v1519
    %v1521 = vpop.xlane.xlu0 %1520
    %v1522 = vsel %vm267, %v1518, 0.0
    %1523 = vadd.xlane.f32.xlu0 %v1522
    %v1524 = vpop.xlane.xlu0 %1523
    %v1525 = vrcp.pop %v1521
    %v1526 = vrcp.pop %v1524
    %v1527 = vmul.f32 %v1516, %v1525
    %v1528 = vmul.f32 %v1518, %v1526
    %v1529 = vpack.c.bf16 %v1527, %v1527
    %v1530 = vpack.c.bf16 %v1528, %v1528
    %1531 = vrot.lane.b32.xlu0 %v1237, 48
    %v1532 = vpop.permute.xlu0 %1531
    %v1534 = vsel %vm267, %v1529, 0
    %v1537 = vsel %vm344, %v1532, 0
    %1539 = vmatpush.bf16.msra.mxu0 0
    %1540 = vmatpush.bf16.msra.mxu0 0
    %1541 = vmatpush.bf16.msra.mxu0 0
    %1542 = vmatpush.bf16.msra.mxu0 0
    %1543 = vmatpush.bf16.msra.mxu0 0
    %1544 = vmatpush.bf16.msra.mxu0 0
    %1545 = vmatpush.bf16.msra.mxu0 0
    %1546 = vmatpush.bf16.msra.mxu0 %v1537
    %1547 = vmatmul.bf16.gmra.mxu0 %v1534
    %v1548 = vpop.f32.mrf.mxu0
    %v1549 = vadd.f32 0.0, %v1548
    %v1550 = vpop.f32.mrf.mxu0
    %1551 = vdwg.mxu0
    %1552 = vrot.lane.b32.xlu0 %v1261, 48
    %v1553 = vpop.permute.xlu0 %1552
    %v1555 = vsel %vm267, %v1530, 0
    %v1558 = vsel %vm344, %v1553, 0
    %1560 = vmatpush.bf16.msra.mxu0 0
    %1561 = vmatpush.bf16.msra.mxu0 0
    %1562 = vmatpush.bf16.msra.mxu0 0
    %1563 = vmatpush.bf16.msra.mxu0 0
    %1564 = vmatpush.bf16.msra.mxu0 0
    %1565 = vmatpush.bf16.msra.mxu0 0
    %1566 = vmatpush.bf16.msra.mxu0 0
    %1567 = vmatpush.bf16.msra.mxu0 %v1558
    %1568 = vmatmul.bf16.gmra.mxu0 %v1555
    %v1569 = vpop.f32.mrf.mxu0
    %v1570 = vadd.f32 0.0, %v1569
    %v1571 = vpop.f32.mrf.mxu0
    %1572 = vdwg.mxu0
    %1573 = vrot.lane.b32.xlu0 %v1237, 104
    %v1574 = vpop.permute.xlu0 %1573
    %1575 = vrot.lane.b32.xlu0 %v1237, 72
    %v1576 = vpop.permute.xlu0 %1575
    %v1578 = vsel %vm267, %v1574, 0
    %v1581 = vsel %vm267, %v1576, 0
    %1583 = vmatpush.bf16.xpose.msra.mxu0 0
    %1584 = vmatpush.bf16.xpose.msra.mxu0 0
    %1585 = vmatpush.bf16.xpose.msra.mxu0 0
    %1586 = vmatpush.bf16.xpose.msra.mxu0 0
    %1587 = vmatpush.bf16.xpose.msra.mxu0 0
    %1588 = vmatpush.bf16.xpose.msra.mxu0 0
    %1589 = vmatpush.bf16.xpose.msra.mxu0 0
    %1590 = vmatpush.bf16.xpose.msra.mxu0 %v1581
    %1591 = vmatmul.bf16.gmra.mxu0 %v1578
    %v1592 = vpop.f32.mrf.mxu0
    %v1593 = vadd.f32 0.0, %v1592
    %v1594 = vpop.f32.mrf.mxu0
    %1595 = vdwg.mxu0
    %1596 = vrot.lane.b32.xlu0 %v1261, 104
    %v1597 = vpop.permute.xlu0 %1596
    %1598 = vrot.lane.b32.xlu0 %v1261, 72
    %v1599 = vpop.permute.xlu0 %1598
    %v1601 = vsel %vm267, %v1597, 0
    %v1604 = vsel %vm267, %v1599, 0
    %1606 = vmatpush.bf16.xpose.msra.mxu0 0
    %1607 = vmatpush.bf16.xpose.msra.mxu0 0
    %1608 = vmatpush.bf16.xpose.msra.mxu0 0
    %1609 = vmatpush.bf16.xpose.msra.mxu0 0
    %1610 = vmatpush.bf16.xpose.msra.mxu0 0
    %1611 = vmatpush.bf16.xpose.msra.mxu0 0
    %1612 = vmatpush.bf16.xpose.msra.mxu0 0
    %1613 = vmatpush.bf16.xpose.msra.mxu0 %v1604
    %1614 = vmatmul.bf16.gmra.mxu0 %v1601
    %v1615 = vpop.f32.mrf.mxu0
    %v1616 = vadd.f32 0.0, %v1615
    %v1617 = vpop.f32.mrf.mxu0
    %1618 = vdwg.mxu0
    %v1619 = vsel %vm267, %v1593, -inf
    %1620 = vmax.xlane.f32.xlu0 %v1619
    %v1621 = vpop.xlane.xlu0 %1620
    %v1622 = vsel %vm267, %v1616, -inf
    %1623 = vmax.xlane.f32.xlu0 %v1622
    %v1624 = vpop.xlane.xlu0 %1623
    %v1625 = vsub.f32 %v1593, %v1621
    %v1626 = vsub.f32 %v1616, %v1624
    %v1627 = vmul.f32 %v1625, 1.442695
    %v1628 = vpow.pop %v1627
    %v1629 = vmul.f32 %v1626, 1.442695
    %v1630 = vpow.pop %v1629
    %v1631 = vsel %vm267, %v1628, 0.0
    %1632 = vadd.xlane.f32.xlu0 %v1631
    %v1633 = vpop.xlane.xlu0 %1632
    %v1634 = vsel %vm267, %v1630, 0.0
    %1635 = vadd.xlane.f32.xlu0 %v1634
    %v1636 = vpop.xlane.xlu0 %1635
    %v1637 = vrcp.pop %v1633
    %v1638 = vrcp.pop %v1636
    %v1639 = vmul.f32 %v1628, %v1637
    %v1640 = vmul.f32 %v1630, %v1638
    %v1641 = vpack.c.bf16 %v1639, %v1639
    %v1642 = vpack.c.bf16 %v1640, %v1640
    %1643 = vrot.lane.b32.xlu0 %v1237, 40
    %v1644 = vpop.permute.xlu0 %1643
    %v1646 = vsel %vm267, %v1641, 0
    %v1649 = vsel %vm344, %v1644, 0
    %1651 = vmatpush.bf16.msra.mxu0 0
    %1652 = vmatpush.bf16.msra.mxu0 0
    %1653 = vmatpush.bf16.msra.mxu0 0
    %1654 = vmatpush.bf16.msra.mxu0 0
    %1655 = vmatpush.bf16.msra.mxu0 0
    %1656 = vmatpush.bf16.msra.mxu0 0
    %1657 = vmatpush.bf16.msra.mxu0 0
    %1658 = vmatpush.bf16.msra.mxu0 %v1649
    %1659 = vmatmul.bf16.gmra.mxu0 %v1646
    %v1660 = vpop.f32.mrf.mxu0
    %v1661 = vadd.f32 0.0, %v1660
    %v1662 = vpop.f32.mrf.mxu0
    %1663 = vdwg.mxu0
    %1664 = vrot.lane.b32.xlu0 %v1261, 40
    %v1665 = vpop.permute.xlu0 %1664
    %v1667 = vsel %vm267, %v1642, 0
    %v1670 = vsel %vm344, %v1665, 0
    %1672 = vmatpush.bf16.msra.mxu0 0
    %1673 = vmatpush.bf16.msra.mxu0 0
    %1674 = vmatpush.bf16.msra.mxu0 0
    %1675 = vmatpush.bf16.msra.mxu0 0
    %1676 = vmatpush.bf16.msra.mxu0 0
    %1677 = vmatpush.bf16.msra.mxu0 0
    %1678 = vmatpush.bf16.msra.mxu0 0
    %1679 = vmatpush.bf16.msra.mxu0 %v1670
    %1680 = vmatmul.bf16.gmra.mxu0 %v1667
    %v1681 = vpop.f32.mrf.mxu0
    %v1682 = vadd.f32 0.0, %v1681
    %v1683 = vpop.f32.mrf.mxu0
    %1684 = vdwg.mxu0
    %1687 = vrot.lane.b32.xlu0 %v1437, 8
    %v1688 = vpop.permute.xlu0 %1687
    %1689 = vrot.lane.b32.xlu0 %v1458, 8
    %v1690 = vpop.permute.xlu0 %1689
    %1695 = vrot.lane.b32.xlu0 %v1549, 16
    %v1696 = vpop.permute.xlu0 %1695
    %1697 = vrot.lane.b32.xlu0 %v1570, 16
    %v1698 = vpop.permute.xlu0 %1697
    %1703 = vrot.lane.b32.xlu0 %v1661, 24
    %v1704 = vpop.permute.xlu0 %1703
    %1705 = vrot.lane.b32.xlu0 %v1682, 24
    %v1706 = vpop.permute.xlu0 %1705
    %v1709 = vsel %vm267, %v1325, %v1688
    %v1710 = vsel %vm267, %v1346, %v1690
    %v1711 = vsel %vm756, %v1709, %v1696
    %v1712 = vsel %vm756, %v1710, %v1698
    %v1713 = vsel %vm759, %v1711, %v1704
    %v1714 = vsel %vm759, %v1712, %v1706
    %v1715 = vpack.c.bf16 %v1714, %v1713
    %v1717 = vsel %vm242, %v1715, 0
    %1719 = vmatpush.bf16.msra.mxu0 0
    %1720 = vmatpush.bf16.msra.mxu0 0
    %1721 = vmatpush.bf16.msra.mxu0 0
    %1722 = vmatpush.bf16.msra.mxu0 0
    %1723 = vmatpush.bf16.msra.mxu0 0
    %1724 = vmatpush.bf16.msra.mxu0 0
    %1725 = vmatpush.bf16.msra.mxu0 %v772
    %1726 = vmatpush.bf16.msra.mxu0 %v771
    %1727 = vmatmul.bf16.gmra.mxu0 %v1717
    %v1728 = vpop.f32.mrf.mxu0
    %v1729 = vadd.f32 %v132, %v1728
    %v1730 = vpop.f32.mrf.mxu0
    %v1731 = vadd.f32 %v132, %v1730
    %1732 = vdwg.mxu0
    %v1733 = vadd.f32 %v1213, %v1729
    %v1734 = vadd.f32 %v1214, %v1731
    %v1735 = vsel %vm242, %v1733, 0.0
    %1736 = vadd.xlane.f32.xlu0 %v1735
    %v1737 = vpop.xlane.xlu0 %1736
    %v1738 = vsel %vm242, %v1734, 0.0
    %1739 = vadd.xlane.f32.xlu0 %v1738
    %v1740 = vpop.xlane.xlu0 %1739
    %v1741 = vmul.f32 %v1737, %v806
    %v1742 = vmul.f32 %v1740, %v806
    %v1743 = vsub.f32 %v1733, %v1741
    %v1744 = vsub.f32 %v1734, %v1742
    %v1745 = vmul.f32 %v1743, %v1743
    %v1746 = vmul.f32 %v1744, %v1744
    %v1747 = vsel %vm242, %v1745, 0.0
    %1748 = vadd.xlane.f32.xlu0 %v1747
    %v1749 = vpop.xlane.xlu0 %1748
    %v1750 = vsel %vm242, %v1746, 0.0
    %1751 = vadd.xlane.f32.xlu0 %v1750
    %v1752 = vpop.xlane.xlu0 %1751
    %v1753 = vmul.f32 %v1749, %v806
    %v1754 = vmul.f32 %v1752, %v806
    %v1755 = vadd.f32 %v1753, 1e-05
    %v1756 = vadd.f32 %v1754, 1e-05
    %v1757 = vrsqrt.pop %v1755
    %v1758 = vmul.f32 %v1757, %v1755
    %v1759 = vmul.f32 %v1758, %v1757
    %v1760 = vmul.f32 0.5, %v1759
    %v1761 = vsub.f32 1.5, %v1760
    %v1762 = vmul.f32 %v1757, %v1761
    %vm1763 = vweird.f32 %v1755
    %vm1764 = vweird.f32 %v1757
    %vm1765 = vmor %vm1763, %vm1764
    %v1766 = vsel %vm1765, %v1757, %v1762
    %v1767 = vrsqrt.pop %v1756
    %v1768 = vmul.f32 %v1767, %v1756
    %v1769 = vmul.f32 %v1768, %v1767
    %v1770 = vmul.f32 0.5, %v1769
    %v1771 = vsub.f32 1.5, %v1770
    %v1772 = vmul.f32 %v1767, %v1771
    %vm1773 = vweird.f32 %v1756
    %vm1774 = vweird.f32 %v1767
    %vm1775 = vmor %vm1773, %vm1774
    %v1776 = vsel %vm1775, %v1767, %v1772
    %v1777 = vmul.f32 %v1743, %v1766
    %v1778 = vmul.f32 %v1744, %v1776
    %v1779 = vmul.f32 %v1777, %v133
    %v1780 = vmul.f32 %v1778, %v133
    %v1781 = vadd.f32 %v1779, %v134
    %v1782 = vadd.f32 %v1780, %v134
    %v1783 = vpack.c.bf16 %v1782, %v1781
    %v1785 = vsel %vm242, %v1783, 0
    %1787 = vmatpush.bf16.msra.mxu0 0
    %1788 = vmatpush.bf16.msra.mxu0 0
    %1789 = vmatpush.bf16.msra.mxu0 0
    %1790 = vmatpush.bf16.msra.mxu0 0
    %1791 = vmatpush.bf16.msra.mxu0 0
    %1792 = vmatpush.bf16.msra.mxu0 0
    %1793 = vmatpush.bf16.msra.mxu0 %v859
    %1794 = vmatpush.bf16.msra.mxu0 %v858
    %1795 = vmatmul.bf16.gmra.mxu0 %v1785
    %v1796 = vpop.f32.mrf.mxu0
    %v1797 = vadd.f32 %v135, %v1796
    %v1798 = vpop.f32.mrf.mxu0
    %v1799 = vadd.f32 %v135, %v1798
    %1800 = vdwg.mxu0
    %v1801 = vsel %vm879, %v1797, -inf
    %1802 = vmax.xlane.f32.xlu0 %v1801
    %v1803 = vpop.xlane.xlu0 %1802
    %v1804 = vsel %vm879, %v1799, -inf
    %1805 = vmax.xlane.f32.xlu0 %v1804
    %v1806 = vpop.xlane.xlu0 %1805
    %v1807 = vsub.f32 %v1797, %v1803
    %v1808 = vsub.f32 %v1799, %v1806
    %v1809 = vmul.f32 %v1807, 1.442695
    %v1810 = vpow.pop %v1809
    %v1811 = vmul.f32 %v1808, 1.442695
    %v1812 = vpow.pop %v1811
    %v1813 = vsel %vm879, %v1810, 0.0
    %1814 = vadd.xlane.f32.xlu0 %v1813
    %v1815 = vpop.xlane.xlu0 %1814
    %v1816 = vsel %vm879, %v1812, 0.0
    %1817 = vadd.xlane.f32.xlu0 %v1816
    %v1818 = vpop.xlane.xlu0 %1817
    %v1819 = vrcp.pop %v1815
    %v1820 = vrcp.pop %v1818
    %v1821 = vmul.f32 %v1810, %v1819
    %v1822 = vmul.f32 %v1812, %v1820
    %1823 = vmatpush.bf16.msra.mxu0 0
    %1824 = vmatpush.bf16.msra.mxu0 0
    %1825 = vmatpush.bf16.msra.mxu0 0
    %1826 = vmatpush.bf16.msra.mxu0 0
    %1827 = vmatpush.bf16.msra.mxu0 0
    %1828 = vmatpush.bf16.msra.mxu0 0
    %1829 = vmatpush.bf16.msra.mxu0 %v921
    %1830 = vmatpush.bf16.msra.mxu0 %v919
    %1831 = vmatmul.bf16.gmra.mxu0 %v1785
    %v1832 = vpop.f32.mrf.mxu0
    %v1833 = vadd.f32 %v903, %v1832
    %v1834 = vpop.f32.mrf.mxu0
    %v1835 = vadd.f32 %v903, %v1834
    %1836 = vdwg.mxu0
    %1837 = vmatpush.bf16.msra.mxu0 0
    %1838 = vmatpush.bf16.msra.mxu0 0
    %1839 = vmatpush.bf16.msra.mxu0 0
    %1840 = vmatpush.bf16.msra.mxu0 0
    %1841 = vmatpush.bf16.msra.mxu0 0
    %1842 = vmatpush.bf16.msra.mxu0 0
    %1843 = vmatpush.bf16.msra.mxu0 %v922
    %1844 = vmatpush.bf16.msra.mxu0 %v920
    %1845 = vmatmul.bf16.gmra.mxu0 %v1785
    %v1846 = vpop.f32.mrf.mxu0
    %v1847 = vadd.f32 %v904, %v1846
    %v1848 = vpop.f32.mrf.mxu0
    %v1849 = vadd.f32 %v904, %v1848
    %1850 = vdwg.mxu0
    %v1851 = vmax.f32 %v1833, 0.0
    %v1852 = vmax.f32 %v1847, 0.0
    %v1853 = vmax.f32 %v1835, 0.0
    %v1854 = vmax.f32 %v1849, 0.0
    %v1855 = vpack.c.bf16 %v1822, %v1821
    %v1857 = vsel %vm879, %v1855, 0
    %1859 = vmatpush.bf16.msra.mxu0 0
    %1860 = vmatpush.bf16.msra.mxu0 0
    %1861 = vmatpush.bf16.msra.mxu0 0
    %1862 = vmatpush.bf16.msra.mxu0 0
    %1863 = vmatpush.bf16.msra.mxu0 0
    %1864 = vmatpush.bf16.msra.mxu0 0
    %1865 = vmatpush.bf16.msra.mxu0 0
    %1866 = vmatpush.bf16.msra.mxu0 %v970
    %1867 = vmatmul.bf16.gmra.mxu0 %v1857
    %v1868 = vpop.f32.mrf.mxu0
    %v1869 = vadd.f32 0.0, %v1868
    %v1870 = vpop.f32.mrf.mxu0
    %v1871 = vadd.f32 0.0, %v1870
    %1872 = vdwg.mxu0
    %1873 = vmatpush.bf16.msra.mxu0 0
    %1874 = vmatpush.bf16.msra.mxu0 0
    %1875 = vmatpush.bf16.msra.mxu0 0
    %1876 = vmatpush.bf16.msra.mxu0 0
    %1877 = vmatpush.bf16.msra.mxu0 0
    %1878 = vmatpush.bf16.msra.mxu0 0
    %1879 = vmatpush.bf16.msra.mxu0 0
    %1880 = vmatpush.bf16.msra.mxu0 %v973
    %1881 = vmatmul.bf16.gmra.mxu0 %v1857
    %v1882 = vpop.f32.mrf.mxu0
    %v1883 = vadd.f32 0.0, %v1882
    %v1884 = vpop.f32.mrf.mxu0
    %v1885 = vadd.f32 0.0, %v1884
    %1886 = vdwg.mxu0
    %v1887 = vmul.f32 %v1851, %v1869
    %v1888 = vmul.f32 %v1852, %v1883
    %v1889 = vmul.f32 %v1853, %v1871
    %v1890 = vmul.f32 %v1854, %v1885
    %v1891 = vpack.c.bf16 %v1889, %v1887
    %v1892 = vpack.c.bf16 %v1890, %v1888
    %v1894 = vsel %vm879, %v1821, 0
    %v1897 = vsel %vm879, %v1822, 0
    %1899 = vmatpush.msra.mxu0 0.0
    %1900 = vmatpush.msra.mxu0 0.0
    %1901 = vmatpush.msra.mxu0 0.0
    %1902 = vmatpush.msra.mxu0 0.0
    %1903 = vmatpush.msra.mxu0 0.0
    %1904 = vmatpush.msra.mxu0 0.0
    %1905 = vmatpush.msra.mxu0 0.0
    %1906 = vmatpush.msra.mxu0 0.0
    %1907 = vmatpush.msra.mxu0 0.0
    %1908 = vmatpush.msra.mxu0 0.0
    %1909 = vmatpush.msra.mxu0 0.0
    %1910 = vmatpush.msra.mxu0 0.0
    %1911 = vmatpush.msra.mxu0 0.0
    %1912 = vmatpush.msra.mxu0 0.0
    %1913 = vmatpush.msra.mxu0 0.0
    %1914 = vmatpush.msra.mxu0 %v1016
    %1915 = vmatmul.f32.gmra.mxu0 %v1894
    %v1916 = vpop.f32.mrf.mxu0
    %v1917 = vadd.f32 0.0, %v1916
    %1918 = vmatmul.f32.gmra.mxu0 %v1897
    %v1919 = vpop.f32.mrf.mxu0
    %v1920 = vadd.f32 0.0, %v1919
    %1921 = vdwg.mxu0
    %1922 = vmatpush.bf16.msra.mxu0 %v1112
    %1923 = vmatpush.bf16.msra.mxu0 %v1111
    %1924 = vmatpush.bf16.msra.mxu0 %v1110
    %1925 = vmatpush.bf16.msra.mxu0 %v1109
    %1926 = vmatpush.bf16.msra.mxu0 %v1108
    %1927 = vmatpush.bf16.msra.mxu0 %v1107
    %1928 = vmatpush.bf16.msra.mxu0 %v1106
    %1929 = vmatpush.bf16.msra.mxu0 %v1105
    %1930 = vmatmul.bf16.gmra.mxu0 %v1891
    %v1931 = vpop.f32.mrf.mxu0
    %v1932 = vadd.f32 %v1917, %v1931
    %v1933 = vpop.f32.mrf.mxu0
    %v1934 = vadd.f32 %v1920, %v1933
    %1935 = vdwg.mxu0
    %1936 = vmatpush.bf16.msra.mxu0 %v1120
    %1937 = vmatpush.bf16.msra.mxu0 %v1119
    %1938 = vmatpush.bf16.msra.mxu0 %v1118
    %1939 = vmatpush.bf16.msra.mxu0 %v1117
    %1940 = vmatpush.bf16.msra.mxu0 %v1116
    %1941 = vmatpush.bf16.msra.mxu0 %v1115
    %1942 = vmatpush.bf16.msra.mxu0 %v1114
    %1943 = vmatpush.bf16.msra.mxu0 %v1113
    %1944 = vmatmul.bf16.gmra.mxu0 %v1892
    %v1945 = vpop.f32.mrf.mxu0
    %v1946 = vadd.f32 %v1932, %v1945
    %v1947 = vpop.f32.mrf.mxu0
    %v1948 = vadd.f32 %v1934, %v1947
    %1949 = vdwg.mxu0
    %v1950 = vadd.f32 %v1781, %v1946
    %v1951 = vadd.f32 %v1782, %v1948
    %v1952 = vsel %vm242, %v1950, 0.0
    %1953 = vadd.xlane.f32.xlu0 %v1952
    %v1954 = vpop.xlane.xlu0 %1953
    %v1955 = vsel %vm242, %v1951, 0.0
    %1956 = vadd.xlane.f32.xlu0 %v1955
    %v1957 = vpop.xlane.xlu0 %1956
    %v1958 = vmul.f32 %v1954, %v806
    %v1959 = vmul.f32 %v1957, %v806
    %v1960 = vsub.f32 %v1950, %v1958
    %v1961 = vsub.f32 %v1951, %v1959
    %v1962 = vmul.f32 %v1960, %v1960
    %v1963 = vmul.f32 %v1961, %v1961
    %v1964 = vsel %vm242, %v1962, 0.0
    %1965 = vadd.xlane.f32.xlu0 %v1964
    %v1966 = vpop.xlane.xlu0 %1965
    %v1967 = vsel %vm242, %v1963, 0.0
    %1968 = vadd.xlane.f32.xlu0 %v1967
    %v1969 = vpop.xlane.xlu0 %1968
    %v1970 = vmul.f32 %v1966, %v806
    %v1971 = vmul.f32 %v1969, %v806
    %v1972 = vadd.f32 %v1970, 1e-05
    %v1973 = vadd.f32 %v1971, 1e-05
    %v1974 = vrsqrt.pop %v1972
    %v1975 = vmul.f32 %v1974, %v1972
    %v1976 = vmul.f32 %v1975, %v1974
    %v1977 = vmul.f32 0.5, %v1976
    %v1978 = vsub.f32 1.5, %v1977
    %v1979 = vmul.f32 %v1974, %v1978
    %vm1980 = vweird.f32 %v1972
    %vm1981 = vweird.f32 %v1974
    %vm1982 = vmor %vm1980, %vm1981
    %v1983 = vsel %vm1982, %v1974, %v1979
    %v1984 = vrsqrt.pop %v1973
    %v1985 = vmul.f32 %v1984, %v1973
    %v1986 = vmul.f32 %v1985, %v1984
    %v1987 = vmul.f32 0.5, %v1986
    %v1988 = vsub.f32 1.5, %v1987
    %v1989 = vmul.f32 %v1984, %v1988
    %vm1990 = vweird.f32 %v1973
    %vm1991 = vweird.f32 %v1984
    %vm1992 = vmor %vm1990, %vm1991
    %v1993 = vsel %vm1992, %v1984, %v1989
    %v1994 = vmul.f32 %v1960, %v1983
    %v1995 = vmul.f32 %v1961, %v1993
    %v1996 = vmul.f32 %v1994, %v139
    %v1997 = vmul.f32 %v1995, %v139
    %v1998 = vadd.f32 %v1996, %v140
    %v1999 = vadd.f32 %v1997, %v140
    %2000 = vst.msk [vmem:[#allocation10] sm:$0xff] %vm242, %v1998
    %2001 = vst.msk [vmem:[#allocation10 + $0x8] sm:$0xff] %vm242, %v1999
    // Predicated region
    $region34: #{tpu_custom_call.1} parent=1 // pred_check
      _
    $region35: #{tpu_custom_call.1} parent=1 // pred_check_branch
      %2003 = sbr.rel (0) target = $region37
    $region36: #{tpu_custom_call.1} parent=1 // pred_region
      %2005 = vsyncadd [#allocation4], 0
      %s2006 = sshll.u32 [#allocation10], 4
      %s2007 = int_to_ptr.vmem [resolvable:$true] %s2006
      %s2008 = sshll.u32 %s4, 4
      %s2009 = int_to_ptr.hbm [resolvable:$true] %s2008
      %2014 = dma.vmem_to_hbm [thread:$0]  %s2007, 256, %s2009, [#allocation4], 128, 128, 8
    $region37: #{tpu_custom_call.1} parent=1 // pred_fallthru
      _
    // Predicated region
    $region38: #{tpu_custom_call.1} parent=1 // pred_check
      _
    $region39: #{tpu_custom_call.1} parent=1 // pred_check_branch
      %2016 = sbr.rel (0) target = $region41
    $region40: #{tpu_custom_call.1} parent=1 // pred_region
      %2018 = dma.done [#allocation4], 256
    $region41: #{tpu_custom_call.1} parent=1 // pred_fallthru
      _
    %2019 = vsyncpa [#allocation3], 1
    %2020 = vsyncpa [#allocation6], 1
    %2021 = vsyncpa [#allocation9], 1
    %2022 = vsyncpa [#allocation4], 1

</llo_original>
